<compile_context>
chip_gen: v7x
topology: tpu7x:2x2x1
jax: 0.10.0
libtpu: 0.0.40
codegen_flags: <defaults>
</compile_context>

<pallas_src>
import functools

import jax
import jax.numpy as jnp
import numpy as np
from jax.experimental import pallas as pl
from jax.experimental.pallas import tpu as pltpu


# ----------------------------------------------------------------------------
# Fused Pallas kernel
# ----------------------------------------------------------------------------

def _matvec(x, m_ref):
    """y[b, n] = sum_k x[b, k] * m_ref[k, n].

    K and N are tiny (<= 32), so this is an exact-f32 VPU multiply/add chain
    instead of an MXU matmul (a 4x32x8 matmul is <1% of an MXU tile and the
    VPU path avoids any f32 matmul precision surprises).
    """
    K = m_ref.shape[0]
    acc = x[:, 0:1] * m_ref[0:1, :]
    for k in range(1, K):
        acc = acc + x[:, k:k + 1] * m_ref[k:k + 1, :]
    return acc


def _vat_fused_kernel(emb_ref, d0_ref, logit_ref, w_ref, wt_ref, b_ref, wm_ref,
                      o_ref, *, n_power, xi, eps):
    emb = emb_ref[...]                       # [T, B, D]
    wm = wm_ref[...]                         # [T, B, D]  = mask[t,b]/len_b (bcast over D)
    ql = logit_ref[...]                      # [B, C]     clean logits (constant)
    bias = b_ref[...]                        # [1, C]
    B = ql.shape[0]
    inv_b = 1.0 / float(B)

    # softmax / log-softmax of the clean logits: loop-invariant, computed once.
    qm = jnp.max(ql, axis=1, keepdims=True)
    qe = jnp.exp(ql - qm)
    qs = jnp.sum(qe, axis=1, keepdims=True)
    q = qe / qs
    logq = (ql - qm) - jnp.log(qs)

    def normalize(dd):                       # get_normalized_vector (per t-row)
        m = jnp.max(jnp.abs(dd), axis=2, keepdims=True)
        m = jnp.max(m, axis=1, keepdims=True)             # [T, 1, 1]
        dd = dd / (1e-12 + m)
        s = jnp.sum(dd * dd, axis=2, keepdims=True)
        s = jnp.sum(s, axis=1, keepdims=True)             # [T, 1, 1]
        return dd / jnp.sqrt(1e-6 + s)

    def forward(dd):                         # synthetic model forward
        pooled = jnp.sum((emb + dd) * wm, axis=0)         # [B, D]
        return _matvec(pooled, w_ref) + bias              # [B, C]

    d = d0_ref[...]
    # power iteration; n_power is a small static hyper-parameter (VAT uses 1),
    # so a fully unrolled in-kernel loop is the cheapest form (d stays in VMEM/vregs).
    for _ in range(n_power):
        dn = xi * normalize(d)
        logit_m = forward(dn)
        pm = jnp.max(logit_m, axis=1, keepdims=True)
        pe = jnp.exp(logit_m - pm)
        p = pe / jnp.sum(pe, axis=1, keepdims=True)
        g_logit = (p - q) * inv_b                         # dKL/dlogit_m   [B, C]
        g_pooled = _matvec(g_logit, wt_ref)               # contract C via W^T -> [B, D]
        d = wm * g_pooled[None, :, :]                     # dKL/dd         [T, B, D]

    r_vadv = eps * normalize(d)
    logit_m = forward(r_vadv)
    pm = jnp.max(logit_m, axis=1, keepdims=True)
    logp = (logit_m - pm) - jnp.log(
        jnp.sum(jnp.exp(logit_m - pm), axis=1, keepdims=True))
    per = jnp.sum(q * (logq - logp), axis=1, keepdims=True)      # [B, 1]
    o_ref[...] = jnp.sum(per, axis=0, keepdims=True) * inv_b     # [1, 1]


# ----------------------------------------------------------------------------
# Wrapper (mirrors VAT.forward(X, logit, seq_lengths))
# ----------------------------------------------------------------------------

def vat_forward(x_tokens, logit, seq_lengths, params, d0, *, n_power, XI, epsilon):
    E, W, b = params["E"], params["W"], params["b"]
    emb = jnp.take(E, x_tokens, axis=0).astype(jnp.float32)      # [T, B, D]
    # TODO(synk): the embedding gather could be folded into the fused kernel via
    # scalar-prefetched token ids; at these sizes a single XLA gather is negligible.
    T, B = x_tokens.shape
    D = E.shape[1]

    mask = (jnp.arange(T)[:, None] < seq_lengths[None, :]).astype(jnp.float32)   # [T, B]
    wmask = (mask / seq_lengths.astype(jnp.float32)[None, :])[:, :, None]        # [T, B, 1]
    wmask = jnp.broadcast_to(wmask, (T, B, D)).astype(jnp.float32)               # full width

    kernel = functools.partial(_vat_fused_kernel, n_power=int(n_power),
                               xi=float(XI), eps=float(epsilon))
    vmem = pl.BlockSpec(memory_space=pltpu.MemorySpace.VMEM)
    out = pl.pallas_call(
        kernel,
        out_shape=jax.ShapeDtypeStruct((1, 1), jnp.float32),
        in_specs=[vmem] * 7,
        out_specs=vmem,
    )(emb, d0, logit, W, W.T, b, wmask)
    return out[0, 0]


# ----------------------------------------------------------------------------
# Pure-JAX reference (same synthetic model, gradient via jax.grad)
# ----------------------------------------------------------------------------

def _ref_norm(d):
    m = jnp.max(jnp.abs(d), axis=(1, 2), keepdims=True)
    d = d / (1e-12 + m)
    return d / jnp.sqrt(1e-6 + jnp.sum(d * d, axis=(1, 2), keepdims=True))


def _ref_kl(q_logit, p_logit):
    q = jax.nn.softmax(q_logit, axis=1)
    lq = jax.nn.log_softmax(q_logit, axis=1)
    lp = jax.nn.log_softmax(p_logit, axis=1)
    return jnp.mean(jnp.sum(q * lq, axis=1)) - jnp.mean(jnp.sum(q * lp, axis=1))


def vat_forward_ref(x_tokens, logit, seq_lengths, params, d0, *, n_power, XI, epsilon):
    E, W, b = params["E"], params["W"], params["b"]
    emb = jnp.take(E, x_tokens, axis=0).astype(jnp.float32)
    T, B = x_tokens.shape
    D = E.shape[1]
    mask = (jnp.arange(T)[:, None] < seq_lengths[None, :]).astype(jnp.float32)
    wmask = jnp.broadcast_to(
        (mask / seq_lengths.astype(jnp.float32)[None, :])[:, :, None], (T, B, D))

    def fwd(dd):
        pooled = jnp.sum((emb + dd) * wmask, axis=0)
        return jnp.dot(pooled, W, precision=jax.lax.Precision.HIGHEST) + b

    d = d0
    for _ in range(n_power):
        dn = XI * _ref_norm(d)
        d = jax.grad(lambda dd: _ref_kl(logit, fwd(dd)))(dn)
    r = epsilon * _ref_norm(d)
    return _ref_kl(logit, fwd(r))


# ----------------------------------------------------------------------------
# Main
# ----------------------------------------------------------------------------

if __name__ == "__main__":
    T, B, D, V, C = 8, 4, 32, 16, 8
    # n_power / XI / epsilon are hyper-parameters of the VAT module.  XI=0.5 (rather
    # than the traditional 1e-6) keeps the perturbed logits well above the float32
    # rounding noise floor so the kernel-vs-autograd comparison is numerically
    # meaningful; the VAT math/semantics are unchanged for any XI.
    n_power, XI, epsilon = 1, 0.5, 2.0

    key = jax.random.PRNGKey(0)
    k_e, k_w, k_x, k_d = jax.random.split(key, 4)

    params = {
        "E": 0.1 * jax.random.normal(k_e, (V, D), jnp.float32),
        "W": 0.1 * jax.random.normal(k_w, (D, C), jnp.float32),
        "b": jnp.zeros((1, C), jnp.float32),
    }

    # inputs: x is [T, B] tokens (seq-major, matching `num_sample = x.shape[1]`)
    x_tokens = jax.random.randint(k_x, (T, B), 0, V, dtype=jnp.int32)
    seq_lengths = jnp.array([8, 5, 3, 8], dtype=jnp.int32)
    d0 = jax.random.normal(k_d, (T, B, D), dtype=jnp.float32)    # torch.randn_like(emb)

    # clean logits from the synthetic model with d = 0 (VAT takes `logit` as input)
    emb = jnp.take(params["E"], x_tokens, axis=0)
    mask = (jnp.arange(T)[:, None] < seq_lengths[None, :]).astype(jnp.float32)
    pooled0 = jnp.sum(
        emb * (mask / seq_lengths.astype(jnp.float32)[None, :])[:, :, None], axis=0)
    logit = jnp.dot(pooled0, params["W"],
                    precision=jax.lax.Precision.HIGHEST) + params["b"]

    vat_fn = jax.jit(functools.partial(vat_forward, n_power=n_power, XI=XI,
                                       epsilon=epsilon))
    loss = jax.block_until_ready(vat_fn(x_tokens, logit, seq_lengths, params, d0))

    loss_ref = jax.block_until_ready(
        vat_forward_ref(x_tokens, logit, seq_lengths, params, d0,
                        n_power=n_power, XI=XI, epsilon=epsilon))

    assert np.isfinite(float(loss))
    np.testing.assert_allclose(np.asarray(loss), np.asarray(loss_ref),
                               rtol=2e-2, atol=1e-4)
    print("KERNEL_OK")
</pallas_src>

<mosaic_0001>
module attributes {stable_mosaic.version = 11 : i64} {
  func.func @_vat_fused_kernel(%arg0: memref<8x4x32xf32, #tpu.memory_space<vmem>>, %arg1: memref<8x4x32xf32, #tpu.memory_space<vmem>>, %arg2: memref<4x8xf32, #tpu.memory_space<vmem>>, %arg3: memref<32x8xf32, #tpu.memory_space<vmem>>, %arg4: memref<8x32xf32, #tpu.memory_space<vmem>>, %arg5: memref<1x8xf32, #tpu.memory_space<vmem>>, %arg6: memref<8x4x32xf32, #tpu.memory_space<vmem>>, %arg7: memref<1x1xf32, #tpu.memory_space<vmem>>) attributes {dimension_semantics = [], scalar_prefetch = 0 : i64, scratch_operands = 0 : i64, tpu.core_type = #tpu.core_type<tc>} {
    %c0 = arith.constant 0 : index
    %c0_0 = arith.constant 0 : index
    %c0_1 = arith.constant 0 : index
    %0 = vector.load %arg0[%c0, %c0_0, %c0_1] : memref<8x4x32xf32, #tpu.memory_space<vmem>>, vector<8x4x32xf32>
    %c0_2 = arith.constant 0 : index
    %c0_3 = arith.constant 0 : index
    %c0_4 = arith.constant 0 : index
    %1 = vector.load %arg6[%c0_2, %c0_3, %c0_4] : memref<8x4x32xf32, #tpu.memory_space<vmem>>, vector<8x4x32xf32>
    %c0_5 = arith.constant 0 : index
    %c0_6 = arith.constant 0 : index
    %2 = vector.load %arg2[%c0_5, %c0_6] : memref<4x8xf32, #tpu.memory_space<vmem>>, vector<4x8xf32>
    %c0_7 = arith.constant 0 : index
    %c0_8 = arith.constant 0 : index
    %3 = vector.load %arg5[%c0_7, %c0_8] : memref<1x8xf32, #tpu.memory_space<vmem>>, vector<1x8xf32>
    %cst = arith.constant dense<0xFF800000> : vector<4xf32>
    %4 = vector.multi_reduction <maximumf>, %2, %cst [1] : vector<4x8xf32> to vector<4xf32>
    %5 = vector.shape_cast %4 : vector<4xf32> to vector<4x1xf32>
    %6 = vector.broadcast %5 : vector<4x1xf32> to vector<4x8xf32>
    %7 = arith.subf %2, %6 : vector<4x8xf32>
    %8 = math.exp %7 : vector<4x8xf32>
    %cst_9 = arith.constant dense<0.000000e+00> : vector<4xf32>
    %9 = vector.multi_reduction <add>, %8, %cst_9 [1] : vector<4x8xf32> to vector<4xf32>
    %10 = vector.shape_cast %9 : vector<4xf32> to vector<4x1xf32>
    %11 = vector.broadcast %10 : vector<4x1xf32> to vector<4x8xf32>
    %12 = arith.divf %8, %11 : vector<4x8xf32>
    %13 = vector.broadcast %5 : vector<4x1xf32> to vector<4x8xf32>
    %14 = arith.subf %2, %13 : vector<4x8xf32>
    %15 = math.log %10 : vector<4x1xf32>
    %16 = vector.broadcast %15 : vector<4x1xf32> to vector<4x8xf32>
    %17 = arith.subf %14, %16 : vector<4x8xf32>
    %c0_10 = arith.constant 0 : index
    %c0_11 = arith.constant 0 : index
    %c0_12 = arith.constant 0 : index
    %18 = vector.load %arg1[%c0_10, %c0_11, %c0_12] : memref<8x4x32xf32, #tpu.memory_space<vmem>>, vector<8x4x32xf32>
    %19 = math.absf %18 : vector<8x4x32xf32>
    %cst_13 = arith.constant dense<0xFF800000> : vector<8x4xf32>
    %20 = vector.multi_reduction <maximumf>, %19, %cst_13 [2] : vector<8x4x32xf32> to vector<8x4xf32>
    %21 = vector.shape_cast %20 : vector<8x4xf32> to vector<8x4x1xf32>
    %cst_14 = arith.constant dense<0xFF800000> : vector<8x1xf32>
    %22 = vector.multi_reduction <maximumf>, %21, %cst_14 [1] : vector<8x4x1xf32> to vector<8x1xf32>
    %23 = vector.shape_cast %22 : vector<8x1xf32> to vector<8x1x1xf32>
    %cst_15 = arith.constant 9.99999996E-13 : f32
    %24 = vector.broadcast %cst_15 : f32 to vector<8x1x1xf32>
    %25 = arith.addf %24, %23 : vector<8x1x1xf32>
    %26 = vector.broadcast %25 : vector<8x1x1xf32> to vector<8x4x32xf32>
    %27 = arith.divf %18, %26 : vector<8x4x32xf32>
    %28 = arith.mulf %27, %27 : vector<8x4x32xf32>
    %cst_16 = arith.constant dense<0.000000e+00> : vector<8x4xf32>
    %29 = vector.multi_reduction <add>, %28, %cst_16 [2] : vector<8x4x32xf32> to vector<8x4xf32>
    %30 = vector.shape_cast %29 : vector<8x4xf32> to vector<8x4x1xf32>
    %cst_17 = arith.constant dense<0.000000e+00> : vector<8x1xf32>
    %31 = vector.multi_reduction <add>, %30, %cst_17 [1] : vector<8x4x1xf32> to vector<8x1xf32>
    %32 = vector.shape_cast %31 : vector<8x1xf32> to vector<8x1x1xf32>
    %cst_18 = arith.constant 9.99999997E-7 : f32
    %33 = vector.broadcast %cst_18 : f32 to vector<8x1x1xf32>
    %34 = arith.addf %33, %32 : vector<8x1x1xf32>
    %35 = math.sqrt %34 : vector<8x1x1xf32>
    %36 = vector.broadcast %35 : vector<8x1x1xf32> to vector<8x4x32xf32>
    %37 = arith.divf %27, %36 : vector<8x4x32xf32>
    %cst_19 = arith.constant 5.000000e-01 : f32
    %38 = vector.broadcast %cst_19 : f32 to vector<8x4x32xf32>
    %39 = arith.mulf %38, %37 : vector<8x4x32xf32>
    %40 = arith.addf %0, %39 : vector<8x4x32xf32>
    %41 = arith.mulf %40, %1 : vector<8x4x32xf32>
    %cst_20 = arith.constant dense<0.000000e+00> : vector<4x32xf32>
    %42 = vector.multi_reduction <add>, %41, %cst_20 [0] : vector<8x4x32xf32> to vector<4x32xf32>
    %43 = vector.extract_strided_slice %42 {offsets = [0, 0], sizes = [4, 1], strides = [1, 1]} : vector<4x32xf32> to vector<4x1xf32>
    %c0_21 = arith.constant 0 : index
    %c0_22 = arith.constant 0 : index
    %44 = vector.load %arg3[%c0_21, %c0_22] : memref<32x8xf32, #tpu.memory_space<vmem>>, vector<1x8xf32>
    %45 = vector.broadcast %43 : vector<4x1xf32> to vector<4x8xf32>
    %46 = vector.broadcast %44 : vector<1x8xf32> to vector<4x8xf32>
    %47 = arith.mulf %45, %46 : vector<4x8xf32>
    %48 = vector.extract_strided_slice %42 {offsets = [0, 1], sizes = [4, 1], strides = [1, 1]} : vector<4x32xf32> to vector<4x1xf32>
    %c1 = arith.constant 1 : index
    %c0_23 = arith.constant 0 : index
    %49 = vector.load %arg3[%c1, %c0_23] : memref<32x8xf32, #tpu.memory_space<vmem>>, vector<1x8xf32>
    %50 = vector.broadcast %48 : vector<4x1xf32> to vector<4x8xf32>
    %51 = vector.broadcast %49 : vector<1x8xf32> to vector<4x8xf32>
    %52 = arith.mulf %50, %51 : vector<4x8xf32>
    %53 = arith.addf %47, %52 : vector<4x8xf32>
    %54 = vector.extract_strided_slice %42 {offsets = [0, 2], sizes = [4, 1], strides = [1, 1]} : vector<4x32xf32> to vector<4x1xf32>
    %c2 = arith.constant 2 : index
    %c0_24 = arith.constant 0 : index
    %55 = vector.load %arg3[%c2, %c0_24] : memref<32x8xf32, #tpu.memory_space<vmem>>, vector<1x8xf32>
    %56 = vector.broadcast %54 : vector<4x1xf32> to vector<4x8xf32>
    %57 = vector.broadcast %55 : vector<1x8xf32> to vector<4x8xf32>
    %58 = arith.mulf %56, %57 : vector<4x8xf32>
    %59 = arith.addf %53, %58 : vector<4x8xf32>
    %60 = vector.extract_strided_slice %42 {offsets = [0, 3], sizes = [4, 1], strides = [1, 1]} : vector<4x32xf32> to vector<4x1xf32>
    %c3 = arith.constant 3 : index
    %c0_25 = arith.constant 0 : index
    %61 = vector.load %arg3[%c3, %c0_25] : memref<32x8xf32, #tpu.memory_space<vmem>>, vector<1x8xf32>
    %62 = vector.broadcast %60 : vector<4x1xf32> to vector<4x8xf32>
    %63 = vector.broadcast %61 : vector<1x8xf32> to vector<4x8xf32>
    %64 = arith.mulf %62, %63 : vector<4x8xf32>
    %65 = arith.addf %59, %64 : vector<4x8xf32>
    %66 = vector.extract_strided_slice %42 {offsets = [0, 4], sizes = [4, 1], strides = [1, 1]} : vector<4x32xf32> to vector<4x1xf32>
    %c4 = arith.constant 4 : index
    %c0_26 = arith.constant 0 : index
    %67 = vector.load %arg3[%c4, %c0_26] : memref<32x8xf32, #tpu.memory_space<vmem>>, vector<1x8xf32>
    %68 = vector.broadcast %66 : vector<4x1xf32> to vector<4x8xf32>
    %69 = vector.broadcast %67 : vector<1x8xf32> to vector<4x8xf32>
    %70 = arith.mulf %68, %69 : vector<4x8xf32>
    %71 = arith.addf %65, %70 : vector<4x8xf32>
    %72 = vector.extract_strided_slice %42 {offsets = [0, 5], sizes = [4, 1], strides = [1, 1]} : vector<4x32xf32> to vector<4x1xf32>
    %c5 = arith.constant 5 : index
    %c0_27 = arith.constant 0 : index
    %73 = vector.load %arg3[%c5, %c0_27] : memref<32x8xf32, #tpu.memory_space<vmem>>, vector<1x8xf32>
    %74 = vector.broadcast %72 : vector<4x1xf32> to vector<4x8xf32>
    %75 = vector.broadcast %73 : vector<1x8xf32> to vector<4x8xf32>
    %76 = arith.mulf %74, %75 : vector<4x8xf32>
    %77 = arith.addf %71, %76 : vector<4x8xf32>
    %78 = vector.extract_strided_slice %42 {offsets = [0, 6], sizes = [4, 1], strides = [1, 1]} : vector<4x32xf32> to vector<4x1xf32>
    %c6 = arith.constant 6 : index
    %c0_28 = arith.constant 0 : index
    %79 = vector.load %arg3[%c6, %c0_28] : memref<32x8xf32, #tpu.memory_space<vmem>>, vector<1x8xf32>
    %80 = vector.broadcast %78 : vector<4x1xf32> to vector<4x8xf32>
    %81 = vector.broadcast %79 : vector<1x8xf32> to vector<4x8xf32>
    %82 = arith.mulf %80, %81 : vector<4x8xf32>
    %83 = arith.addf %77, %82 : vector<4x8xf32>
    %84 = vector.extract_strided_slice %42 {offsets = [0, 7], sizes = [4, 1], strides = [1, 1]} : vector<4x32xf32> to vector<4x1xf32>
    %c7 = arith.constant 7 : index
    %c0_29 = arith.constant 0 : index
    %85 = vector.load %arg3[%c7, %c0_29] : memref<32x8xf32, #tpu.memory_space<vmem>>, vector<1x8xf32>
    %86 = vector.broadcast %84 : vector<4x1xf32> to vector<4x8xf32>
    %87 = vector.broadcast %85 : vector<1x8xf32> to vector<4x8xf32>
    %88 = arith.mulf %86, %87 : vector<4x8xf32>
    %89 = arith.addf %83, %88 : vector<4x8xf32>
    %90 = vector.extract_strided_slice %42 {offsets = [0, 8], sizes = [4, 1], strides = [1, 1]} : vector<4x32xf32> to vector<4x1xf32>
    %c8 = arith.constant 8 : index
    %c0_30 = arith.constant 0 : index
    %91 = vector.load %arg3[%c8, %c0_30] : memref<32x8xf32, #tpu.memory_space<vmem>>, vector<1x8xf32>
    %92 = vector.broadcast %90 : vector<4x1xf32> to vector<4x8xf32>
    %93 = vector.broadcast %91 : vector<1x8xf32> to vector<4x8xf32>
    %94 = arith.mulf %92, %93 : vector<4x8xf32>
    %95 = arith.addf %89, %94 : vector<4x8xf32>
    %96 = vector.extract_strided_slice %42 {offsets = [0, 9], sizes = [4, 1], strides = [1, 1]} : vector<4x32xf32> to vector<4x1xf32>
    %c9 = arith.constant 9 : index
    %c0_31 = arith.constant 0 : index
    %97 = vector.load %arg3[%c9, %c0_31] : memref<32x8xf32, #tpu.memory_space<vmem>>, vector<1x8xf32>
    %98 = vector.broadcast %96 : vector<4x1xf32> to vector<4x8xf32>
    %99 = vector.broadcast %97 : vector<1x8xf32> to vector<4x8xf32>
    %100 = arith.mulf %98, %99 : vector<4x8xf32>
    %101 = arith.addf %95, %100 : vector<4x8xf32>
    %102 = vector.extract_strided_slice %42 {offsets = [0, 10], sizes = [4, 1], strides = [1, 1]} : vector<4x32xf32> to vector<4x1xf32>
    %c10 = arith.constant 10 : index
    %c0_32 = arith.constant 0 : index
    %103 = vector.load %arg3[%c10, %c0_32] : memref<32x8xf32, #tpu.memory_space<vmem>>, vector<1x8xf32>
    %104 = vector.broadcast %102 : vector<4x1xf32> to vector<4x8xf32>
    %105 = vector.broadcast %103 : vector<1x8xf32> to vector<4x8xf32>
    %106 = arith.mulf %104, %105 : vector<4x8xf32>
    %107 = arith.addf %101, %106 : vector<4x8xf32>
    %108 = vector.extract_strided_slice %42 {offsets = [0, 11], sizes = [4, 1], strides = [1, 1]} : vector<4x32xf32> to vector<4x1xf32>
    %c11 = arith.constant 11 : index
    %c0_33 = arith.constant 0 : index
    %109 = vector.load %arg3[%c11, %c0_33] : memref<32x8xf32, #tpu.memory_space<vmem>>, vector<1x8xf32>
    %110 = vector.broadcast %108 : vector<4x1xf32> to vector<4x8xf32>
    %111 = vector.broadcast %109 : vector<1x8xf32> to vector<4x8xf32>
    %112 = arith.mulf %110, %111 : vector<4x8xf32>
    %113 = arith.addf %107, %112 : vector<4x8xf32>
    %114 = vector.extract_strided_slice %42 {offsets = [0, 12], sizes = [4, 1], strides = [1, 1]} : vector<4x32xf32> to vector<4x1xf32>
    %c12 = arith.constant 12 : index
    %c0_34 = arith.constant 0 : index
    %115 = vector.load %arg3[%c12, %c0_34] : memref<32x8xf32, #tpu.memory_space<vmem>>, vector<1x8xf32>
    %116 = vector.broadcast %114 : vector<4x1xf32> to vector<4x8xf32>
    %117 = vector.broadcast %115 : vector<1x8xf32> to vector<4x8xf32>
    %118 = arith.mulf %116, %117 : vector<4x8xf32>
    %119 = arith.addf %113, %118 : vector<4x8xf32>
    %120 = vector.extract_strided_slice %42 {offsets = [0, 13], sizes = [4, 1], strides = [1, 1]} : vector<4x32xf32> to vector<4x1xf32>
    %c13 = arith.constant 13 : index
    %c0_35 = arith.constant 0 : index
    %121 = vector.load %arg3[%c13, %c0_35] : memref<32x8xf32, #tpu.memory_space<vmem>>, vector<1x8xf32>
    %122 = vector.broadcast %120 : vector<4x1xf32> to vector<4x8xf32>
    %123 = vector.broadcast %121 : vector<1x8xf32> to vector<4x8xf32>
    %124 = arith.mulf %122, %123 : vector<4x8xf32>
    %125 = arith.addf %119, %124 : vector<4x8xf32>
    %126 = vector.extract_strided_slice %42 {offsets = [0, 14], sizes = [4, 1], strides = [1, 1]} : vector<4x32xf32> to vector<4x1xf32>
    %c14 = arith.constant 14 : index
    %c0_36 = arith.constant 0 : index
    %127 = vector.load %arg3[%c14, %c0_36] : memref<32x8xf32, #tpu.memory_space<vmem>>, vector<1x8xf32>
    %128 = vector.broadcast %126 : vector<4x1xf32> to vector<4x8xf32>
    %129 = vector.broadcast %127 : vector<1x8xf32> to vector<4x8xf32>
    %130 = arith.mulf %128, %129 : vector<4x8xf32>
    %131 = arith.addf %125, %130 : vector<4x8xf32>
    %132 = vector.extract_strided_slice %42 {offsets = [0, 15], sizes = [4, 1], strides = [1, 1]} : vector<4x32xf32> to vector<4x1xf32>
    %c15 = arith.constant 15 : index
    %c0_37 = arith.constant 0 : index
    %133 = vector.load %arg3[%c15, %c0_37] : memref<32x8xf32, #tpu.memory_space<vmem>>, vector<1x8xf32>
    %134 = vector.broadcast %132 : vector<4x1xf32> to vector<4x8xf32>
    %135 = vector.broadcast %133 : vector<1x8xf32> to vector<4x8xf32>
    %136 = arith.mulf %134, %135 : vector<4x8xf32>
    %137 = arith.addf %131, %136 : vector<4x8xf32>
    %138 = vector.extract_strided_slice %42 {offsets = [0, 16], sizes = [4, 1], strides = [1, 1]} : vector<4x32xf32> to vector<4x1xf32>
    %c16 = arith.constant 16 : index
    %c0_38 = arith.constant 0 : index
    %139 = vector.load %arg3[%c16, %c0_38] : memref<32x8xf32, #tpu.memory_space<vmem>>, vector<1x8xf32>
    %140 = vector.broadcast %138 : vector<4x1xf32> to vector<4x8xf32>
    %141 = vector.broadcast %139 : vector<1x8xf32> to vector<4x8xf32>
    %142 = arith.mulf %140, %141 : vector<4x8xf32>
    %143 = arith.addf %137, %142 : vector<4x8xf32>
    %144 = vector.extract_strided_slice %42 {offsets = [0, 17], sizes = [4, 1], strides = [1, 1]} : vector<4x32xf32> to vector<4x1xf32>
    %c17 = arith.constant 17 : index
    %c0_39 = arith.constant 0 : index
    %145 = vector.load %arg3[%c17, %c0_39] : memref<32x8xf32, #tpu.memory_space<vmem>>, vector<1x8xf32>
    %146 = vector.broadcast %144 : vector<4x1xf32> to vector<4x8xf32>
    %147 = vector.broadcast %145 : vector<1x8xf32> to vector<4x8xf32>
    %148 = arith.mulf %146, %147 : vector<4x8xf32>
    %149 = arith.addf %143, %148 : vector<4x8xf32>
    %150 = vector.extract_strided_slice %42 {offsets = [0, 18], sizes = [4, 1], strides = [1, 1]} : vector<4x32xf32> to vector<4x1xf32>
    %c18 = arith.constant 18 : index
    %c0_40 = arith.constant 0 : index
    %151 = vector.load %arg3[%c18, %c0_40] : memref<32x8xf32, #tpu.memory_space<vmem>>, vector<1x8xf32>
    %152 = vector.broadcast %150 : vector<4x1xf32> to vector<4x8xf32>
    %153 = vector.broadcast %151 : vector<1x8xf32> to vector<4x8xf32>
    %154 = arith.mulf %152, %153 : vector<4x8xf32>
    %155 = arith.addf %149, %154 : vector<4x8xf32>
    %156 = vector.extract_strided_slice %42 {offsets = [0, 19], sizes = [4, 1], strides = [1, 1]} : vector<4x32xf32> to vector<4x1xf32>
    %c19 = arith.constant 19 : index
    %c0_41 = arith.constant 0 : index
    %157 = vector.load %arg3[%c19, %c0_41] : memref<32x8xf32, #tpu.memory_space<vmem>>, vector<1x8xf32>
    %158 = vector.broadcast %156 : vector<4x1xf32> to vector<4x8xf32>
    %159 = vector.broadcast %157 : vector<1x8xf32> to vector<4x8xf32>
    %160 = arith.mulf %158, %159 : vector<4x8xf32>
    %161 = arith.addf %155, %160 : vector<4x8xf32>
    %162 = vector.extract_strided_slice %42 {offsets = [0, 20], sizes = [4, 1], strides = [1, 1]} : vector<4x32xf32> to vector<4x1xf32>
    %c20 = arith.constant 20 : index
    %c0_42 = arith.constant 0 : index
    %163 = vector.load %arg3[%c20, %c0_42] : memref<32x8xf32, #tpu.memory_space<vmem>>, vector<1x8xf32>
    %164 = vector.broadcast %162 : vector<4x1xf32> to vector<4x8xf32>
    %165 = vector.broadcast %163 : vector<1x8xf32> to vector<4x8xf32>
    %166 = arith.mulf %164, %165 : vector<4x8xf32>
    %167 = arith.addf %161, %166 : vector<4x8xf32>
    %168 = vector.extract_strided_slice %42 {offsets = [0, 21], sizes = [4, 1], strides = [1, 1]} : vector<4x32xf32> to vector<4x1xf32>
    %c21 = arith.constant 21 : index
    %c0_43 = arith.constant 0 : index
    %169 = vector.load %arg3[%c21, %c0_43] : memref<32x8xf32, #tpu.memory_space<vmem>>, vector<1x8xf32>
    %170 = vector.broadcast %168 : vector<4x1xf32> to vector<4x8xf32>
    %171 = vector.broadcast %169 : vector<1x8xf32> to vector<4x8xf32>
    %172 = arith.mulf %170, %171 : vector<4x8xf32>
    %173 = arith.addf %167, %172 : vector<4x8xf32>
    %174 = vector.extract_strided_slice %42 {offsets = [0, 22], sizes = [4, 1], strides = [1, 1]} : vector<4x32xf32> to vector<4x1xf32>
    %c22 = arith.constant 22 : index
    %c0_44 = arith.constant 0 : index
    %175 = vector.load %arg3[%c22, %c0_44] : memref<32x8xf32, #tpu.memory_space<vmem>>, vector<1x8xf32>
    %176 = vector.broadcast %174 : vector<4x1xf32> to vector<4x8xf32>
    %177 = vector.broadcast %175 : vector<1x8xf32> to vector<4x8xf32>
    %178 = arith.mulf %176, %177 : vector<4x8xf32>
    %179 = arith.addf %173, %178 : vector<4x8xf32>
    %180 = vector.extract_strided_slice %42 {offsets = [0, 23], sizes = [4, 1], strides = [1, 1]} : vector<4x32xf32> to vector<4x1xf32>
    %c23 = arith.constant 23 : index
    %c0_45 = arith.constant 0 : index
    %181 = vector.load %arg3[%c23, %c0_45] : memref<32x8xf32, #tpu.memory_space<vmem>>, vector<1x8xf32>
    %182 = vector.broadcast %180 : vector<4x1xf32> to vector<4x8xf32>
    %183 = vector.broadcast %181 : vector<1x8xf32> to vector<4x8xf32>
    %184 = arith.mulf %182, %183 : vector<4x8xf32>
    %185 = arith.addf %179, %184 : vector<4x8xf32>
    %186 = vector.extract_strided_slice %42 {offsets = [0, 24], sizes = [4, 1], strides = [1, 1]} : vector<4x32xf32> to vector<4x1xf32>
    %c24 = arith.constant 24 : index
    %c0_46 = arith.constant 0 : index
    %187 = vector.load %arg3[%c24, %c0_46] : memref<32x8xf32, #tpu.memory_space<vmem>>, vector<1x8xf32>
    %188 = vector.broadcast %186 : vector<4x1xf32> to vector<4x8xf32>
    %189 = vector.broadcast %187 : vector<1x8xf32> to vector<4x8xf32>
    %190 = arith.mulf %188, %189 : vector<4x8xf32>
    %191 = arith.addf %185, %190 : vector<4x8xf32>
    %192 = vector.extract_strided_slice %42 {offsets = [0, 25], sizes = [4, 1], strides = [1, 1]} : vector<4x32xf32> to vector<4x1xf32>
    %c25 = arith.constant 25 : index
    %c0_47 = arith.constant 0 : index
    %193 = vector.load %arg3[%c25, %c0_47] : memref<32x8xf32, #tpu.memory_space<vmem>>, vector<1x8xf32>
    %194 = vector.broadcast %192 : vector<4x1xf32> to vector<4x8xf32>
    %195 = vector.broadcast %193 : vector<1x8xf32> to vector<4x8xf32>
    %196 = arith.mulf %194, %195 : vector<4x8xf32>
    %197 = arith.addf %191, %196 : vector<4x8xf32>
    %198 = vector.extract_strided_slice %42 {offsets = [0, 26], sizes = [4, 1], strides = [1, 1]} : vector<4x32xf32> to vector<4x1xf32>
    %c26 = arith.constant 26 : index
    %c0_48 = arith.constant 0 : index
    %199 = vector.load %arg3[%c26, %c0_48] : memref<32x8xf32, #tpu.memory_space<vmem>>, vector<1x8xf32>
    %200 = vector.broadcast %198 : vector<4x1xf32> to vector<4x8xf32>
    %201 = vector.broadcast %199 : vector<1x8xf32> to vector<4x8xf32>
    %202 = arith.mulf %200, %201 : vector<4x8xf32>
    %203 = arith.addf %197, %202 : vector<4x8xf32>
    %204 = vector.extract_strided_slice %42 {offsets = [0, 27], sizes = [4, 1], strides = [1, 1]} : vector<4x32xf32> to vector<4x1xf32>
    %c27 = arith.constant 27 : index
    %c0_49 = arith.constant 0 : index
    %205 = vector.load %arg3[%c27, %c0_49] : memref<32x8xf32, #tpu.memory_space<vmem>>, vector<1x8xf32>
    %206 = vector.broadcast %204 : vector<4x1xf32> to vector<4x8xf32>
    %207 = vector.broadcast %205 : vector<1x8xf32> to vector<4x8xf32>
    %208 = arith.mulf %206, %207 : vector<4x8xf32>
    %209 = arith.addf %203, %208 : vector<4x8xf32>
    %210 = vector.extract_strided_slice %42 {offsets = [0, 28], sizes = [4, 1], strides = [1, 1]} : vector<4x32xf32> to vector<4x1xf32>
    %c28 = arith.constant 28 : index
    %c0_50 = arith.constant 0 : index
    %211 = vector.load %arg3[%c28, %c0_50] : memref<32x8xf32, #tpu.memory_space<vmem>>, vector<1x8xf32>
    %212 = vector.broadcast %210 : vector<4x1xf32> to vector<4x8xf32>
    %213 = vector.broadcast %211 : vector<1x8xf32> to vector<4x8xf32>
    %214 = arith.mulf %212, %213 : vector<4x8xf32>
    %215 = arith.addf %209, %214 : vector<4x8xf32>
    %216 = vector.extract_strided_slice %42 {offsets = [0, 29], sizes = [4, 1], strides = [1, 1]} : vector<4x32xf32> to vector<4x1xf32>
    %c29 = arith.constant 29 : index
    %c0_51 = arith.constant 0 : index
    %217 = vector.load %arg3[%c29, %c0_51] : memref<32x8xf32, #tpu.memory_space<vmem>>, vector<1x8xf32>
    %218 = vector.broadcast %216 : vector<4x1xf32> to vector<4x8xf32>
    %219 = vector.broadcast %217 : vector<1x8xf32> to vector<4x8xf32>
    %220 = arith.mulf %218, %219 : vector<4x8xf32>
    %221 = arith.addf %215, %220 : vector<4x8xf32>
    %222 = vector.extract_strided_slice %42 {offsets = [0, 30], sizes = [4, 1], strides = [1, 1]} : vector<4x32xf32> to vector<4x1xf32>
    %c30 = arith.constant 30 : index
    %c0_52 = arith.constant 0 : index
    %223 = vector.load %arg3[%c30, %c0_52] : memref<32x8xf32, #tpu.memory_space<vmem>>, vector<1x8xf32>
    %224 = vector.broadcast %222 : vector<4x1xf32> to vector<4x8xf32>
    %225 = vector.broadcast %223 : vector<1x8xf32> to vector<4x8xf32>
    %226 = arith.mulf %224, %225 : vector<4x8xf32>
    %227 = arith.addf %221, %226 : vector<4x8xf32>
    %228 = vector.extract_strided_slice %42 {offsets = [0, 31], sizes = [4, 1], strides = [1, 1]} : vector<4x32xf32> to vector<4x1xf32>
    %c31 = arith.constant 31 : index
    %c0_53 = arith.constant 0 : index
    %229 = vector.load %arg3[%c31, %c0_53] : memref<32x8xf32, #tpu.memory_space<vmem>>, vector<1x8xf32>
    %230 = vector.broadcast %228 : vector<4x1xf32> to vector<4x8xf32>
    %231 = vector.broadcast %229 : vector<1x8xf32> to vector<4x8xf32>
    %232 = arith.mulf %230, %231 : vector<4x8xf32>
    %233 = arith.addf %227, %232 : vector<4x8xf32>
    %234 = vector.broadcast %3 : vector<1x8xf32> to vector<4x8xf32>
    %235 = arith.addf %233, %234 : vector<4x8xf32>
    %cst_54 = arith.constant dense<0xFF800000> : vector<4xf32>
    %236 = vector.multi_reduction <maximumf>, %235, %cst_54 [1] : vector<4x8xf32> to vector<4xf32>
    %237 = vector.shape_cast %236 : vector<4xf32> to vector<4x1xf32>
    %238 = vector.broadcast %237 : vector<4x1xf32> to vector<4x8xf32>
    %239 = arith.subf %235, %238 : vector<4x8xf32>
    %240 = math.exp %239 : vector<4x8xf32>
    %cst_55 = arith.constant dense<0.000000e+00> : vector<4xf32>
    %241 = vector.multi_reduction <add>, %240, %cst_55 [1] : vector<4x8xf32> to vector<4xf32>
    %242 = vector.shape_cast %241 : vector<4xf32> to vector<4x1xf32>
    %243 = vector.broadcast %242 : vector<4x1xf32> to vector<4x8xf32>
    %244 = arith.divf %240, %243 : vector<4x8xf32>
    %245 = arith.subf %244, %12 : vector<4x8xf32>
    %cst_56 = arith.constant 2.500000e-01 : f32
    %246 = vector.broadcast %cst_56 : f32 to vector<4x8xf32>
    %247 = arith.mulf %245, %246 : vector<4x8xf32>
    %248 = vector.extract_strided_slice %247 {offsets = [0, 0], sizes = [4, 1], strides = [1, 1]} : vector<4x8xf32> to vector<4x1xf32>
    %c0_57 = arith.constant 0 : index
    %c0_58 = arith.constant 0 : index
    %249 = vector.load %arg4[%c0_57, %c0_58] : memref<8x32xf32, #tpu.memory_space<vmem>>, vector<1x32xf32>
    %250 = vector.broadcast %248 : vector<4x1xf32> to vector<4x32xf32>
    %251 = vector.broadcast %249 : vector<1x32xf32> to vector<4x32xf32>
    %252 = arith.mulf %250, %251 : vector<4x32xf32>
    %253 = vector.extract_strided_slice %247 {offsets = [0, 1], sizes = [4, 1], strides = [1, 1]} : vector<4x8xf32> to vector<4x1xf32>
    %c1_59 = arith.constant 1 : index
    %c0_60 = arith.constant 0 : index
    %254 = vector.load %arg4[%c1_59, %c0_60] : memref<8x32xf32, #tpu.memory_space<vmem>>, vector<1x32xf32>
    %255 = vector.broadcast %253 : vector<4x1xf32> to vector<4x32xf32>
    %256 = vector.broadcast %254 : vector<1x32xf32> to vector<4x32xf32>
    %257 = arith.mulf %255, %256 : vector<4x32xf32>
    %258 = arith.addf %252, %257 : vector<4x32xf32>
    %259 = vector.extract_strided_slice %247 {offsets = [0, 2], sizes = [4, 1], strides = [1, 1]} : vector<4x8xf32> to vector<4x1xf32>
    %c2_61 = arith.constant 2 : index
    %c0_62 = arith.constant 0 : index
    %260 = vector.load %arg4[%c2_61, %c0_62] : memref<8x32xf32, #tpu.memory_space<vmem>>, vector<1x32xf32>
    %261 = vector.broadcast %259 : vector<4x1xf32> to vector<4x32xf32>
    %262 = vector.broadcast %260 : vector<1x32xf32> to vector<4x32xf32>
    %263 = arith.mulf %261, %262 : vector<4x32xf32>
    %264 = arith.addf %258, %263 : vector<4x32xf32>
    %265 = vector.extract_strided_slice %247 {offsets = [0, 3], sizes = [4, 1], strides = [1, 1]} : vector<4x8xf32> to vector<4x1xf32>
    %c3_63 = arith.constant 3 : index
    %c0_64 = arith.constant 0 : index
    %266 = vector.load %arg4[%c3_63, %c0_64] : memref<8x32xf32, #tpu.memory_space<vmem>>, vector<1x32xf32>
    %267 = vector.broadcast %265 : vector<4x1xf32> to vector<4x32xf32>
    %268 = vector.broadcast %266 : vector<1x32xf32> to vector<4x32xf32>
    %269 = arith.mulf %267, %268 : vector<4x32xf32>
    %270 = arith.addf %264, %269 : vector<4x32xf32>
    %271 = vector.extract_strided_slice %247 {offsets = [0, 4], sizes = [4, 1], strides = [1, 1]} : vector<4x8xf32> to vector<4x1xf32>
    %c4_65 = arith.constant 4 : index
    %c0_66 = arith.constant 0 : index
    %272 = vector.load %arg4[%c4_65, %c0_66] : memref<8x32xf32, #tpu.memory_space<vmem>>, vector<1x32xf32>
    %273 = vector.broadcast %271 : vector<4x1xf32> to vector<4x32xf32>
    %274 = vector.broadcast %272 : vector<1x32xf32> to vector<4x32xf32>
    %275 = arith.mulf %273, %274 : vector<4x32xf32>
    %276 = arith.addf %270, %275 : vector<4x32xf32>
    %277 = vector.extract_strided_slice %247 {offsets = [0, 5], sizes = [4, 1], strides = [1, 1]} : vector<4x8xf32> to vector<4x1xf32>
    %c5_67 = arith.constant 5 : index
    %c0_68 = arith.constant 0 : index
    %278 = vector.load %arg4[%c5_67, %c0_68] : memref<8x32xf32, #tpu.memory_space<vmem>>, vector<1x32xf32>
    %279 = vector.broadcast %277 : vector<4x1xf32> to vector<4x32xf32>
    %280 = vector.broadcast %278 : vector<1x32xf32> to vector<4x32xf32>
    %281 = arith.mulf %279, %280 : vector<4x32xf32>
    %282 = arith.addf %276, %281 : vector<4x32xf32>
    %283 = vector.extract_strided_slice %247 {offsets = [0, 6], sizes = [4, 1], strides = [1, 1]} : vector<4x8xf32> to vector<4x1xf32>
    %c6_69 = arith.constant 6 : index
    %c0_70 = arith.constant 0 : index
    %284 = vector.load %arg4[%c6_69, %c0_70] : memref<8x32xf32, #tpu.memory_space<vmem>>, vector<1x32xf32>
    %285 = vector.broadcast %283 : vector<4x1xf32> to vector<4x32xf32>
    %286 = vector.broadcast %284 : vector<1x32xf32> to vector<4x32xf32>
    %287 = arith.mulf %285, %286 : vector<4x32xf32>
    %288 = arith.addf %282, %287 : vector<4x32xf32>
    %289 = vector.extract_strided_slice %247 {offsets = [0, 7], sizes = [4, 1], strides = [1, 1]} : vector<4x8xf32> to vector<4x1xf32>
    %c7_71 = arith.constant 7 : index
    %c0_72 = arith.constant 0 : index
    %290 = vector.load %arg4[%c7_71, %c0_72] : memref<8x32xf32, #tpu.memory_space<vmem>>, vector<1x32xf32>
    %291 = vector.broadcast %289 : vector<4x1xf32> to vector<4x32xf32>
    %292 = vector.broadcast %290 : vector<1x32xf32> to vector<4x32xf32>
    %293 = arith.mulf %291, %292 : vector<4x32xf32>
    %294 = arith.addf %288, %293 : vector<4x32xf32>
    %295 = vector.shape_cast %294 : vector<4x32xf32> to vector<1x4x32xf32>
    %296 = vector.broadcast %295 : vector<1x4x32xf32> to vector<8x4x32xf32>
    %297 = arith.mulf %1, %296 : vector<8x4x32xf32>
    %298 = math.absf %297 : vector<8x4x32xf32>
    %cst_73 = arith.constant dense<0xFF800000> : vector<8x4xf32>
    %299 = vector.multi_reduction <maximumf>, %298, %cst_73 [2] : vector<8x4x32xf32> to vector<8x4xf32>
    %300 = vector.shape_cast %299 : vector<8x4xf32> to vector<8x4x1xf32>
    %cst_74 = arith.constant dense<0xFF800000> : vector<8x1xf32>
    %301 = vector.multi_reduction <maximumf>, %300, %cst_74 [1] : vector<8x4x1xf32> to vector<8x1xf32>
    %302 = vector.shape_cast %301 : vector<8x1xf32> to vector<8x1x1xf32>
    %cst_75 = arith.constant 9.99999996E-13 : f32
    %303 = vector.broadcast %cst_75 : f32 to vector<8x1x1xf32>
    %304 = arith.addf %303, %302 : vector<8x1x1xf32>
    %305 = vector.broadcast %304 : vector<8x1x1xf32> to vector<8x4x32xf32>
    %306 = arith.divf %297, %305 : vector<8x4x32xf32>
    %307 = arith.mulf %306, %306 : vector<8x4x32xf32>
    %cst_76 = arith.constant dense<0.000000e+00> : vector<8x4xf32>
    %308 = vector.multi_reduction <add>, %307, %cst_76 [2] : vector<8x4x32xf32> to vector<8x4xf32>
    %309 = vector.shape_cast %308 : vector<8x4xf32> to vector<8x4x1xf32>
    %cst_77 = arith.constant dense<0.000000e+00> : vector<8x1xf32>
    %310 = vector.multi_reduction <add>, %309, %cst_77 [1] : vector<8x4x1xf32> to vector<8x1xf32>
    %311 = vector.shape_cast %310 : vector<8x1xf32> to vector<8x1x1xf32>
    %cst_78 = arith.constant 9.99999997E-7 : f32
    %312 = vector.broadcast %cst_78 : f32 to vector<8x1x1xf32>
    %313 = arith.addf %312, %311 : vector<8x1x1xf32>
    %314 = math.sqrt %313 : vector<8x1x1xf32>
    %315 = vector.broadcast %314 : vector<8x1x1xf32> to vector<8x4x32xf32>
    %316 = arith.divf %306, %315 : vector<8x4x32xf32>
    %cst_79 = arith.constant 2.000000e+00 : f32
    %317 = vector.broadcast %cst_79 : f32 to vector<8x4x32xf32>
    %318 = arith.mulf %317, %316 : vector<8x4x32xf32>
    %319 = arith.addf %0, %318 : vector<8x4x32xf32>
    %320 = arith.mulf %319, %1 : vector<8x4x32xf32>
    %cst_80 = arith.constant dense<0.000000e+00> : vector<4x32xf32>
    %321 = vector.multi_reduction <add>, %320, %cst_80 [0] : vector<8x4x32xf32> to vector<4x32xf32>
    %322 = vector.extract_strided_slice %321 {offsets = [0, 0], sizes = [4, 1], strides = [1, 1]} : vector<4x32xf32> to vector<4x1xf32>
    %c0_81 = arith.constant 0 : index
    %c0_82 = arith.constant 0 : index
    %323 = vector.load %arg3[%c0_81, %c0_82] : memref<32x8xf32, #tpu.memory_space<vmem>>, vector<1x8xf32>
    %324 = vector.broadcast %322 : vector<4x1xf32> to vector<4x8xf32>
    %325 = vector.broadcast %323 : vector<1x8xf32> to vector<4x8xf32>
    %326 = arith.mulf %324, %325 : vector<4x8xf32>
    %327 = vector.extract_strided_slice %321 {offsets = [0, 1], sizes = [4, 1], strides = [1, 1]} : vector<4x32xf32> to vector<4x1xf32>
    %c1_83 = arith.constant 1 : index
    %c0_84 = arith.constant 0 : index
    %328 = vector.load %arg3[%c1_83, %c0_84] : memref<32x8xf32, #tpu.memory_space<vmem>>, vector<1x8xf32>
    %329 = vector.broadcast %327 : vector<4x1xf32> to vector<4x8xf32>
    %330 = vector.broadcast %328 : vector<1x8xf32> to vector<4x8xf32>
    %331 = arith.mulf %329, %330 : vector<4x8xf32>
    %332 = arith.addf %326, %331 : vector<4x8xf32>
    %333 = vector.extract_strided_slice %321 {offsets = [0, 2], sizes = [4, 1], strides = [1, 1]} : vector<4x32xf32> to vector<4x1xf32>
    %c2_85 = arith.constant 2 : index
    %c0_86 = arith.constant 0 : index
    %334 = vector.load %arg3[%c2_85, %c0_86] : memref<32x8xf32, #tpu.memory_space<vmem>>, vector<1x8xf32>
    %335 = vector.broadcast %333 : vector<4x1xf32> to vector<4x8xf32>
    %336 = vector.broadcast %334 : vector<1x8xf32> to vector<4x8xf32>
    %337 = arith.mulf %335, %336 : vector<4x8xf32>
    %338 = arith.addf %332, %337 : vector<4x8xf32>
    %339 = vector.extract_strided_slice %321 {offsets = [0, 3], sizes = [4, 1], strides = [1, 1]} : vector<4x32xf32> to vector<4x1xf32>
    %c3_87 = arith.constant 3 : index
    %c0_88 = arith.constant 0 : index
    %340 = vector.load %arg3[%c3_87, %c0_88] : memref<32x8xf32, #tpu.memory_space<vmem>>, vector<1x8xf32>
    %341 = vector.broadcast %339 : vector<4x1xf32> to vector<4x8xf32>
    %342 = vector.broadcast %340 : vector<1x8xf32> to vector<4x8xf32>
    %343 = arith.mulf %341, %342 : vector<4x8xf32>
    %344 = arith.addf %338, %343 : vector<4x8xf32>
    %345 = vector.extract_strided_slice %321 {offsets = [0, 4], sizes = [4, 1], strides = [1, 1]} : vector<4x32xf32> to vector<4x1xf32>
    %c4_89 = arith.constant 4 : index
    %c0_90 = arith.constant 0 : index
    %346 = vector.load %arg3[%c4_89, %c0_90] : memref<32x8xf32, #tpu.memory_space<vmem>>, vector<1x8xf32>
    %347 = vector.broadcast %345 : vector<4x1xf32> to vector<4x8xf32>
    %348 = vector.broadcast %346 : vector<1x8xf32> to vector<4x8xf32>
    %349 = arith.mulf %347, %348 : vector<4x8xf32>
    %350 = arith.addf %344, %349 : vector<4x8xf32>
    %351 = vector.extract_strided_slice %321 {offsets = [0, 5], sizes = [4, 1], strides = [1, 1]} : vector<4x32xf32> to vector<4x1xf32>
    %c5_91 = arith.constant 5 : index
    %c0_92 = arith.constant 0 : index
    %352 = vector.load %arg3[%c5_91, %c0_92] : memref<32x8xf32, #tpu.memory_space<vmem>>, vector<1x8xf32>
    %353 = vector.broadcast %351 : vector<4x1xf32> to vector<4x8xf32>
    %354 = vector.broadcast %352 : vector<1x8xf32> to vector<4x8xf32>
    %355 = arith.mulf %353, %354 : vector<4x8xf32>
    %356 = arith.addf %350, %355 : vector<4x8xf32>
    %357 = vector.extract_strided_slice %321 {offsets = [0, 6], sizes = [4, 1], strides = [1, 1]} : vector<4x32xf32> to vector<4x1xf32>
    %c6_93 = arith.constant 6 : index
    %c0_94 = arith.constant 0 : index
    %358 = vector.load %arg3[%c6_93, %c0_94] : memref<32x8xf32, #tpu.memory_space<vmem>>, vector<1x8xf32>
    %359 = vector.broadcast %357 : vector<4x1xf32> to vector<4x8xf32>
    %360 = vector.broadcast %358 : vector<1x8xf32> to vector<4x8xf32>
    %361 = arith.mulf %359, %360 : vector<4x8xf32>
    %362 = arith.addf %356, %361 : vector<4x8xf32>
    %363 = vector.extract_strided_slice %321 {offsets = [0, 7], sizes = [4, 1], strides = [1, 1]} : vector<4x32xf32> to vector<4x1xf32>
    %c7_95 = arith.constant 7 : index
    %c0_96 = arith.constant 0 : index
    %364 = vector.load %arg3[%c7_95, %c0_96] : memref<32x8xf32, #tpu.memory_space<vmem>>, vector<1x8xf32>
    %365 = vector.broadcast %363 : vector<4x1xf32> to vector<4x8xf32>
    %366 = vector.broadcast %364 : vector<1x8xf32> to vector<4x8xf32>
    %367 = arith.mulf %365, %366 : vector<4x8xf32>
    %368 = arith.addf %362, %367 : vector<4x8xf32>
    %369 = vector.extract_strided_slice %321 {offsets = [0, 8], sizes = [4, 1], strides = [1, 1]} : vector<4x32xf32> to vector<4x1xf32>
    %c8_97 = arith.constant 8 : index
    %c0_98 = arith.constant 0 : index
    %370 = vector.load %arg3[%c8_97, %c0_98] : memref<32x8xf32, #tpu.memory_space<vmem>>, vector<1x8xf32>
    %371 = vector.broadcast %369 : vector<4x1xf32> to vector<4x8xf32>
    %372 = vector.broadcast %370 : vector<1x8xf32> to vector<4x8xf32>
    %373 = arith.mulf %371, %372 : vector<4x8xf32>
    %374 = arith.addf %368, %373 : vector<4x8xf32>
    %375 = vector.extract_strided_slice %321 {offsets = [0, 9], sizes = [4, 1], strides = [1, 1]} : vector<4x32xf32> to vector<4x1xf32>
    %c9_99 = arith.constant 9 : index
    %c0_100 = arith.constant 0 : index
    %376 = vector.load %arg3[%c9_99, %c0_100] : memref<32x8xf32, #tpu.memory_space<vmem>>, vector<1x8xf32>
    %377 = vector.broadcast %375 : vector<4x1xf32> to vector<4x8xf32>
    %378 = vector.broadcast %376 : vector<1x8xf32> to vector<4x8xf32>
    %379 = arith.mulf %377, %378 : vector<4x8xf32>
    %380 = arith.addf %374, %379 : vector<4x8xf32>
    %381 = vector.extract_strided_slice %321 {offsets = [0, 10], sizes = [4, 1], strides = [1, 1]} : vector<4x32xf32> to vector<4x1xf32>
    %c10_101 = arith.constant 10 : index
    %c0_102 = arith.constant 0 : index
    %382 = vector.load %arg3[%c10_101, %c0_102] : memref<32x8xf32, #tpu.memory_space<vmem>>, vector<1x8xf32>
    %383 = vector.broadcast %381 : vector<4x1xf32> to vector<4x8xf32>
    %384 = vector.broadcast %382 : vector<1x8xf32> to vector<4x8xf32>
    %385 = arith.mulf %383, %384 : vector<4x8xf32>
    %386 = arith.addf %380, %385 : vector<4x8xf32>
    %387 = vector.extract_strided_slice %321 {offsets = [0, 11], sizes = [4, 1], strides = [1, 1]} : vector<4x32xf32> to vector<4x1xf32>
    %c11_103 = arith.constant 11 : index
    %c0_104 = arith.constant 0 : index
    %388 = vector.load %arg3[%c11_103, %c0_104] : memref<32x8xf32, #tpu.memory_space<vmem>>, vector<1x8xf32>
    %389 = vector.broadcast %387 : vector<4x1xf32> to vector<4x8xf32>
    %390 = vector.broadcast %388 : vector<1x8xf32> to vector<4x8xf32>
    %391 = arith.mulf %389, %390 : vector<4x8xf32>
    %392 = arith.addf %386, %391 : vector<4x8xf32>
    %393 = vector.extract_strided_slice %321 {offsets = [0, 12], sizes = [4, 1], strides = [1, 1]} : vector<4x32xf32> to vector<4x1xf32>
    %c12_105 = arith.constant 12 : index
    %c0_106 = arith.constant 0 : index
    %394 = vector.load %arg3[%c12_105, %c0_106] : memref<32x8xf32, #tpu.memory_space<vmem>>, vector<1x8xf32>
    %395 = vector.broadcast %393 : vector<4x1xf32> to vector<4x8xf32>
    %396 = vector.broadcast %394 : vector<1x8xf32> to vector<4x8xf32>
    %397 = arith.mulf %395, %396 : vector<4x8xf32>
    %398 = arith.addf %392, %397 : vector<4x8xf32>
    %399 = vector.extract_strided_slice %321 {offsets = [0, 13], sizes = [4, 1], strides = [1, 1]} : vector<4x32xf32> to vector<4x1xf32>
    %c13_107 = arith.constant 13 : index
    %c0_108 = arith.constant 0 : index
    %400 = vector.load %arg3[%c13_107, %c0_108] : memref<32x8xf32, #tpu.memory_space<vmem>>, vector<1x8xf32>
    %401 = vector.broadcast %399 : vector<4x1xf32> to vector<4x8xf32>
    %402 = vector.broadcast %400 : vector<1x8xf32> to vector<4x8xf32>
    %403 = arith.mulf %401, %402 : vector<4x8xf32>
    %404 = arith.addf %398, %403 : vector<4x8xf32>
    %405 = vector.extract_strided_slice %321 {offsets = [0, 14], sizes = [4, 1], strides = [1, 1]} : vector<4x32xf32> to vector<4x1xf32>
    %c14_109 = arith.constant 14 : index
    %c0_110 = arith.constant 0 : index
    %406 = vector.load %arg3[%c14_109, %c0_110] : memref<32x8xf32, #tpu.memory_space<vmem>>, vector<1x8xf32>
    %407 = vector.broadcast %405 : vector<4x1xf32> to vector<4x8xf32>
    %408 = vector.broadcast %406 : vector<1x8xf32> to vector<4x8xf32>
    %409 = arith.mulf %407, %408 : vector<4x8xf32>
    %410 = arith.addf %404, %409 : vector<4x8xf32>
    %411 = vector.extract_strided_slice %321 {offsets = [0, 15], sizes = [4, 1], strides = [1, 1]} : vector<4x32xf32> to vector<4x1xf32>
    %c15_111 = arith.constant 15 : index
    %c0_112 = arith.constant 0 : index
    %412 = vector.load %arg3[%c15_111, %c0_112] : memref<32x8xf32, #tpu.memory_space<vmem>>, vector<1x8xf32>
    %413 = vector.broadcast %411 : vector<4x1xf32> to vector<4x8xf32>
    %414 = vector.broadcast %412 : vector<1x8xf32> to vector<4x8xf32>
    %415 = arith.mulf %413, %414 : vector<4x8xf32>
    %416 = arith.addf %410, %415 : vector<4x8xf32>
    %417 = vector.extract_strided_slice %321 {offsets = [0, 16], sizes = [4, 1], strides = [1, 1]} : vector<4x32xf32> to vector<4x1xf32>
    %c16_113 = arith.constant 16 : index
    %c0_114 = arith.constant 0 : index
    %418 = vector.load %arg3[%c16_113, %c0_114] : memref<32x8xf32, #tpu.memory_space<vmem>>, vector<1x8xf32>
    %419 = vector.broadcast %417 : vector<4x1xf32> to vector<4x8xf32>
    %420 = vector.broadcast %418 : vector<1x8xf32> to vector<4x8xf32>
    %421 = arith.mulf %419, %420 : vector<4x8xf32>
    %422 = arith.addf %416, %421 : vector<4x8xf32>
    %423 = vector.extract_strided_slice %321 {offsets = [0, 17], sizes = [4, 1], strides = [1, 1]} : vector<4x32xf32> to vector<4x1xf32>
    %c17_115 = arith.constant 17 : index
    %c0_116 = arith.constant 0 : index
    %424 = vector.load %arg3[%c17_115, %c0_116] : memref<32x8xf32, #tpu.memory_space<vmem>>, vector<1x8xf32>
    %425 = vector.broadcast %423 : vector<4x1xf32> to vector<4x8xf32>
    %426 = vector.broadcast %424 : vector<1x8xf32> to vector<4x8xf32>
    %427 = arith.mulf %425, %426 : vector<4x8xf32>
    %428 = arith.addf %422, %427 : vector<4x8xf32>
    %429 = vector.extract_strided_slice %321 {offsets = [0, 18], sizes = [4, 1], strides = [1, 1]} : vector<4x32xf32> to vector<4x1xf32>
    %c18_117 = arith.constant 18 : index
    %c0_118 = arith.constant 0 : index
    %430 = vector.load %arg3[%c18_117, %c0_118] : memref<32x8xf32, #tpu.memory_space<vmem>>, vector<1x8xf32>
    %431 = vector.broadcast %429 : vector<4x1xf32> to vector<4x8xf32>
    %432 = vector.broadcast %430 : vector<1x8xf32> to vector<4x8xf32>
    %433 = arith.mulf %431, %432 : vector<4x8xf32>
    %434 = arith.addf %428, %433 : vector<4x8xf32>
    %435 = vector.extract_strided_slice %321 {offsets = [0, 19], sizes = [4, 1], strides = [1, 1]} : vector<4x32xf32> to vector<4x1xf32>
    %c19_119 = arith.constant 19 : index
    %c0_120 = arith.constant 0 : index
    %436 = vector.load %arg3[%c19_119, %c0_120] : memref<32x8xf32, #tpu.memory_space<vmem>>, vector<1x8xf32>
    %437 = vector.broadcast %435 : vector<4x1xf32> to vector<4x8xf32>
    %438 = vector.broadcast %436 : vector<1x8xf32> to vector<4x8xf32>
    %439 = arith.mulf %437, %438 : vector<4x8xf32>
    %440 = arith.addf %434, %439 : vector<4x8xf32>
    %441 = vector.extract_strided_slice %321 {offsets = [0, 20], sizes = [4, 1], strides = [1, 1]} : vector<4x32xf32> to vector<4x1xf32>
    %c20_121 = arith.constant 20 : index
    %c0_122 = arith.constant 0 : index
    %442 = vector.load %arg3[%c20_121, %c0_122] : memref<32x8xf32, #tpu.memory_space<vmem>>, vector<1x8xf32>
    %443 = vector.broadcast %441 : vector<4x1xf32> to vector<4x8xf32>
    %444 = vector.broadcast %442 : vector<1x8xf32> to vector<4x8xf32>
    %445 = arith.mulf %443, %444 : vector<4x8xf32>
    %446 = arith.addf %440, %445 : vector<4x8xf32>
    %447 = vector.extract_strided_slice %321 {offsets = [0, 21], sizes = [4, 1], strides = [1, 1]} : vector<4x32xf32> to vector<4x1xf32>
    %c21_123 = arith.constant 21 : index
    %c0_124 = arith.constant 0 : index
    %448 = vector.load %arg3[%c21_123, %c0_124] : memref<32x8xf32, #tpu.memory_space<vmem>>, vector<1x8xf32>
    %449 = vector.broadcast %447 : vector<4x1xf32> to vector<4x8xf32>
    %450 = vector.broadcast %448 : vector<1x8xf32> to vector<4x8xf32>
    %451 = arith.mulf %449, %450 : vector<4x8xf32>
    %452 = arith.addf %446, %451 : vector<4x8xf32>
    %453 = vector.extract_strided_slice %321 {offsets = [0, 22], sizes = [4, 1], strides = [1, 1]} : vector<4x32xf32> to vector<4x1xf32>
    %c22_125 = arith.constant 22 : index
    %c0_126 = arith.constant 0 : index
    %454 = vector.load %arg3[%c22_125, %c0_126] : memref<32x8xf32, #tpu.memory_space<vmem>>, vector<1x8xf32>
    %455 = vector.broadcast %453 : vector<4x1xf32> to vector<4x8xf32>
    %456 = vector.broadcast %454 : vector<1x8xf32> to vector<4x8xf32>
    %457 = arith.mulf %455, %456 : vector<4x8xf32>
    %458 = arith.addf %452, %457 : vector<4x8xf32>
    %459 = vector.extract_strided_slice %321 {offsets = [0, 23], sizes = [4, 1], strides = [1, 1]} : vector<4x32xf32> to vector<4x1xf32>
    %c23_127 = arith.constant 23 : index
    %c0_128 = arith.constant 0 : index
    %460 = vector.load %arg3[%c23_127, %c0_128] : memref<32x8xf32, #tpu.memory_space<vmem>>, vector<1x8xf32>
    %461 = vector.broadcast %459 : vector<4x1xf32> to vector<4x8xf32>
    %462 = vector.broadcast %460 : vector<1x8xf32> to vector<4x8xf32>
    %463 = arith.mulf %461, %462 : vector<4x8xf32>
    %464 = arith.addf %458, %463 : vector<4x8xf32>
    %465 = vector.extract_strided_slice %321 {offsets = [0, 24], sizes = [4, 1], strides = [1, 1]} : vector<4x32xf32> to vector<4x1xf32>
    %c24_129 = arith.constant 24 : index
    %c0_130 = arith.constant 0 : index
    %466 = vector.load %arg3[%c24_129, %c0_130] : memref<32x8xf32, #tpu.memory_space<vmem>>, vector<1x8xf32>
    %467 = vector.broadcast %465 : vector<4x1xf32> to vector<4x8xf32>
    %468 = vector.broadcast %466 : vector<1x8xf32> to vector<4x8xf32>
    %469 = arith.mulf %467, %468 : vector<4x8xf32>
    %470 = arith.addf %464, %469 : vector<4x8xf32>
    %471 = vector.extract_strided_slice %321 {offsets = [0, 25], sizes = [4, 1], strides = [1, 1]} : vector<4x32xf32> to vector<4x1xf32>
    %c25_131 = arith.constant 25 : index
    %c0_132 = arith.constant 0 : index
    %472 = vector.load %arg3[%c25_131, %c0_132] : memref<32x8xf32, #tpu.memory_space<vmem>>, vector<1x8xf32>
    %473 = vector.broadcast %471 : vector<4x1xf32> to vector<4x8xf32>
    %474 = vector.broadcast %472 : vector<1x8xf32> to vector<4x8xf32>
    %475 = arith.mulf %473, %474 : vector<4x8xf32>
    %476 = arith.addf %470, %475 : vector<4x8xf32>
    %477 = vector.extract_strided_slice %321 {offsets = [0, 26], sizes = [4, 1], strides = [1, 1]} : vector<4x32xf32> to vector<4x1xf32>
    %c26_133 = arith.constant 26 : index
    %c0_134 = arith.constant 0 : index
    %478 = vector.load %arg3[%c26_133, %c0_134] : memref<32x8xf32, #tpu.memory_space<vmem>>, vector<1x8xf32>
    %479 = vector.broadcast %477 : vector<4x1xf32> to vector<4x8xf32>
    %480 = vector.broadcast %478 : vector<1x8xf32> to vector<4x8xf32>
    %481 = arith.mulf %479, %480 : vector<4x8xf32>
    %482 = arith.addf %476, %481 : vector<4x8xf32>
    %483 = vector.extract_strided_slice %321 {offsets = [0, 27], sizes = [4, 1], strides = [1, 1]} : vector<4x32xf32> to vector<4x1xf32>
    %c27_135 = arith.constant 27 : index
    %c0_136 = arith.constant 0 : index
    %484 = vector.load %arg3[%c27_135, %c0_136] : memref<32x8xf32, #tpu.memory_space<vmem>>, vector<1x8xf32>
    %485 = vector.broadcast %483 : vector<4x1xf32> to vector<4x8xf32>
    %486 = vector.broadcast %484 : vector<1x8xf32> to vector<4x8xf32>
    %487 = arith.mulf %485, %486 : vector<4x8xf32>
    %488 = arith.addf %482, %487 : vector<4x8xf32>
    %489 = vector.extract_strided_slice %321 {offsets = [0, 28], sizes = [4, 1], strides = [1, 1]} : vector<4x32xf32> to vector<4x1xf32>
    %c28_137 = arith.constant 28 : index
    %c0_138 = arith.constant 0 : index
    %490 = vector.load %arg3[%c28_137, %c0_138] : memref<32x8xf32, #tpu.memory_space<vmem>>, vector<1x8xf32>
    %491 = vector.broadcast %489 : vector<4x1xf32> to vector<4x8xf32>
    %492 = vector.broadcast %490 : vector<1x8xf32> to vector<4x8xf32>
    %493 = arith.mulf %491, %492 : vector<4x8xf32>
    %494 = arith.addf %488, %493 : vector<4x8xf32>
    %495 = vector.extract_strided_slice %321 {offsets = [0, 29], sizes = [4, 1], strides = [1, 1]} : vector<4x32xf32> to vector<4x1xf32>
    %c29_139 = arith.constant 29 : index
    %c0_140 = arith.constant 0 : index
    %496 = vector.load %arg3[%c29_139, %c0_140] : memref<32x8xf32, #tpu.memory_space<vmem>>, vector<1x8xf32>
    %497 = vector.broadcast %495 : vector<4x1xf32> to vector<4x8xf32>
    %498 = vector.broadcast %496 : vector<1x8xf32> to vector<4x8xf32>
    %499 = arith.mulf %497, %498 : vector<4x8xf32>
    %500 = arith.addf %494, %499 : vector<4x8xf32>
    %501 = vector.extract_strided_slice %321 {offsets = [0, 30], sizes = [4, 1], strides = [1, 1]} : vector<4x32xf32> to vector<4x1xf32>
    %c30_141 = arith.constant 30 : index
    %c0_142 = arith.constant 0 : index
    %502 = vector.load %arg3[%c30_141, %c0_142] : memref<32x8xf32, #tpu.memory_space<vmem>>, vector<1x8xf32>
    %503 = vector.broadcast %501 : vector<4x1xf32> to vector<4x8xf32>
    %504 = vector.broadcast %502 : vector<1x8xf32> to vector<4x8xf32>
    %505 = arith.mulf %503, %504 : vector<4x8xf32>
    %506 = arith.addf %500, %505 : vector<4x8xf32>
    %507 = vector.extract_strided_slice %321 {offsets = [0, 31], sizes = [4, 1], strides = [1, 1]} : vector<4x32xf32> to vector<4x1xf32>
    %c31_143 = arith.constant 31 : index
    %c0_144 = arith.constant 0 : index
    %508 = vector.load %arg3[%c31_143, %c0_144] : memref<32x8xf32, #tpu.memory_space<vmem>>, vector<1x8xf32>
    %509 = vector.broadcast %507 : vector<4x1xf32> to vector<4x8xf32>
    %510 = vector.broadcast %508 : vector<1x8xf32> to vector<4x8xf32>
    %511 = arith.mulf %509, %510 : vector<4x8xf32>
    %512 = arith.addf %506, %511 : vector<4x8xf32>
    %513 = vector.broadcast %3 : vector<1x8xf32> to vector<4x8xf32>
    %514 = arith.addf %512, %513 : vector<4x8xf32>
    %cst_145 = arith.constant dense<0xFF800000> : vector<4xf32>
    %515 = vector.multi_reduction <maximumf>, %514, %cst_145 [1] : vector<4x8xf32> to vector<4xf32>
    %516 = vector.shape_cast %515 : vector<4xf32> to vector<4x1xf32>
    %517 = vector.broadcast %516 : vector<4x1xf32> to vector<4x8xf32>
    %518 = arith.subf %514, %517 : vector<4x8xf32>
    %519 = vector.broadcast %516 : vector<4x1xf32> to vector<4x8xf32>
    %520 = arith.subf %514, %519 : vector<4x8xf32>
    %521 = math.exp %520 : vector<4x8xf32>
    %cst_146 = arith.constant dense<0.000000e+00> : vector<4xf32>
    %522 = vector.multi_reduction <add>, %521, %cst_146 [1] : vector<4x8xf32> to vector<4xf32>
    %523 = vector.shape_cast %522 : vector<4xf32> to vector<4x1xf32>
    %524 = math.log %523 : vector<4x1xf32>
    %525 = vector.broadcast %524 : vector<4x1xf32> to vector<4x8xf32>
    %526 = arith.subf %518, %525 : vector<4x8xf32>
    %527 = arith.subf %17, %526 : vector<4x8xf32>
    %528 = arith.mulf %12, %527 : vector<4x8xf32>
    %cst_147 = arith.constant dense<0.000000e+00> : vector<4xf32>
    %529 = vector.multi_reduction <add>, %528, %cst_147 [1] : vector<4x8xf32> to vector<4xf32>
    %530 = vector.shape_cast %529 : vector<4xf32> to vector<4x1xf32>
    %cst_148 = arith.constant dense<0.000000e+00> : vector<1xf32>
    %531 = vector.multi_reduction <add>, %530, %cst_148 [0] : vector<4x1xf32> to vector<1xf32>
    %532 = vector.shape_cast %531 : vector<1xf32> to vector<1x1xf32>
    %cst_149 = arith.constant 2.500000e-01 : f32
    %533 = vector.broadcast %cst_149 : f32 to vector<1x1xf32>
    %534 = arith.mulf %532, %533 : vector<1x1xf32>
    %c0_150 = arith.constant 0 : index
    %c0_151 = arith.constant 0 : index
    %535 = vector.load %arg7[%c0_150, %c0_151] : memref<1x1xf32, #tpu.memory_space<vmem>>, vector<1x1xf32>
    tpu.vector_store %arg7[%c0_150, %c0_151], %534 {strides = array<i32>} : memref<1x1xf32, #tpu.memory_space<vmem>>, vector<1x1xf32>,
    return
  }
}

</mosaic_0001>

<llo_original>
// kernel: vat_forward.1
$region0: #{vat_forward.1}
  #allocation0 [shape = 'u32[]', space=smem, size = 0x4, offset = 0x4, fixed_abs, tag = 'smem constant byte address 0x4 - core index']
  #allocation1 [shape = 'u32[144,128]{1,0:T(1,128)}', space=vmem, size = 0x12000, scoped, tag = 'internal scratch']
  %s0 = inlined_call_operand.vmem [shape: f32[8,4,32], index: 0, kind: input, shape index: {}]
  %s1 = inlined_call_operand.vmem [shape: f32[8,4,32], index: 1, kind: input, shape index: {}]
  %s2 = inlined_call_operand.vmem [shape: f32[4,8], index: 2, kind: input, shape index: {}]
  %s3 = inlined_call_operand.vmem [shape: f32[32,8], index: 3, kind: input, shape index: {}]
  %s4 = inlined_call_operand.vmem [shape: f32[8,32], index: 4, kind: input, shape index: {}]
  %s5 = inlined_call_operand.vmem [shape: f32[1,8], index: 5, kind: input, shape index: {}]
  %s6 = inlined_call_operand.vmem [shape: f32[8,4,32], index: 6, kind: input, shape index: {}]
  %s7 = inlined_call_operand.hbm [shape: f32[1,1], index: 7, kind: output, shape index: {}]
  %s8 = sld [smem:[#allocation0]]
  $region38: #{vat_forward.1} parent=0
    _
  %s10 = ssub.s32 1, %s8
  %s11 = scalar_select 0, %s10, %s8
  $region1: #{vat_forward.1} parent=0
    #allocation2 [shape = 'u8[512]{0}', space=vmem, size = 0x400, scoped, tag = 'output window, operand 0, single buffered']
    #allocation3 [shape = 's32[1]{0}', space=sflag, size = 0x4, scoped, tag = 'scoped memory for vat_forward.1']
    %12 = vsyncpa [#allocation3], 0
    // Predicated region
    $region2: #{vat_forward.1} parent=1 // pred_check
      _
    $region3: #{vat_forward.1} parent=1 // pred_check_branch
      %14 = sbr.rel (0) target = $region5
    $region4: #{vat_forward.1} parent=1 // pred_region
      _
    $region5: #{vat_forward.1} parent=1 // pred_fallthru
      _
    // Predicated region
    $region6: #{vat_forward.1} parent=1 // pred_check
      _
    $region7: #{vat_forward.1} parent=1 // pred_check_branch
      %16 = sbr.rel (0) target = $region9
    $region8: #{vat_forward.1} parent=1 // pred_region
      _
    $region9: #{vat_forward.1} parent=1 // pred_fallthru
      _
    // Predicated region
    $region10: #{vat_forward.1} parent=1 // pred_check
      _
    $region11: #{vat_forward.1} parent=1 // pred_check_branch
      %18 = sbr.rel (0) target = $region13
    $region12: #{vat_forward.1} parent=1 // pred_region
      _
    $region13: #{vat_forward.1} parent=1 // pred_fallthru
      _
    // Predicated region
    $region14: #{vat_forward.1} parent=1 // pred_check
      _
    $region15: #{vat_forward.1} parent=1 // pred_check_branch
      %20 = sbr.rel (0) target = $region17
    $region16: #{vat_forward.1} parent=1 // pred_region
      _
    $region17: #{vat_forward.1} parent=1 // pred_fallthru
      _
    // Predicated region
    $region18: #{vat_forward.1} parent=1 // pred_check
      _
    $region19: #{vat_forward.1} parent=1 // pred_check_branch
      %22 = sbr.rel (0) target = $region21
    $region20: #{vat_forward.1} parent=1 // pred_region
      _
    $region21: #{vat_forward.1} parent=1 // pred_fallthru
      _
    // Predicated region
    $region22: #{vat_forward.1} parent=1 // pred_check
      _
    $region23: #{vat_forward.1} parent=1 // pred_check_branch
      %24 = sbr.rel (0) target = $region25
    $region24: #{vat_forward.1} parent=1 // pred_region
      _
    $region25: #{vat_forward.1} parent=1 // pred_fallthru
      _
    // Predicated region
    $region26: #{vat_forward.1} parent=1 // pred_check
      _
    $region27: #{vat_forward.1} parent=1 // pred_check_branch
      %26 = sbr.rel (0) target = $region29
    $region28: #{vat_forward.1} parent=1 // pred_region
      _
    $region29: #{vat_forward.1} parent=1 // pred_fallthru
      _
    %v27 = vld [vmem:[%s0] sm:$0xf]
    %v28 = vld [vmem:[%s0 + $0x4] sm:$0xf]
    %v29 = vld [vmem:[%s0 + $0x8] sm:$0xf]
    %v30 = vld [vmem:[%s0 + $0xc] sm:$0xf]
    %v31 = vld [vmem:[%s0 + $0x10] sm:$0xf]
    %v32 = vld [vmem:[%s0 + $0x14] sm:$0xf]
    %v33 = vld [vmem:[%s0 + $0x18] sm:$0xf]
    %v34 = vld [vmem:[%s0 + $0x1c] sm:$0xf]
    %v35 = vld [vmem:[%s6] sm:$0xf]
    %v36 = vld [vmem:[%s6 + $0x4] sm:$0xf]
    %v37 = vld [vmem:[%s6 + $0x8] sm:$0xf]
    %v38 = vld [vmem:[%s6 + $0xc] sm:$0xf]
    %v39 = vld [vmem:[%s6 + $0x10] sm:$0xf]
    %v40 = vld [vmem:[%s6 + $0x14] sm:$0xf]
    %v41 = vld [vmem:[%s6 + $0x18] sm:$0xf]
    %v42 = vld [vmem:[%s6 + $0x1c] sm:$0xf]
    %v43 = vld [vmem:[%s2] sm:$0xf]
    %v44 = vld [vmem:[%s5] sm:$0x1]
    %vm45 = vcmask 60416
    %v46 = vsel %vm45, %v43, -inf
    %47 = vmax.xlane.f32.xlu0 %v46
    %v48 = vpop.xlane.xlu0 %47
    %v49 = vsub.f32 %v43, %v48
    %v50 = vmul.f32 %v49, 1.442695
    %v51 = vpow.pop %v50
    %v52 = vsel %vm45, %v51, 0.0
    %53 = vadd.xlane.f32.xlu0 %v52
    %v54 = vpop.xlane.xlu0 %53
    %v55 = vrcp.pop %v54
    %v56 = vmul.f32 %v51, %v55
    %v57 = vlog2.pop %v54
    %v58 = vmul.f32 %v57, 0.6931472
    %v59 = vsub.f32 %v49, %v58
    %v60 = vld [vmem:[%s1] sm:$0xf]
    %v61 = vld [vmem:[%s1 + $0x4] sm:$0xf]
    %v62 = vld [vmem:[%s1 + $0x8] sm:$0xf]
    %v63 = vld [vmem:[%s1 + $0xc] sm:$0xf]
    %v64 = vld [vmem:[%s1 + $0x10] sm:$0xf]
    %v65 = vld [vmem:[%s1 + $0x14] sm:$0xf]
    %v66 = vld [vmem:[%s1 + $0x18] sm:$0xf]
    %v67 = vld [vmem:[%s1 + $0x1c] sm:$0xf]
    %v68 = vand.u32 2147483647, %v60
    %v69 = vand.u32 2147483647, %v61
    %v70 = vand.u32 2147483647, %v62
    %v71 = vand.u32 2147483647, %v63
    %v72 = vand.u32 2147483647, %v64
    %v73 = vand.u32 2147483647, %v65
    %v74 = vand.u32 2147483647, %v66
    %v75 = vand.u32 2147483647, %v67
    %vm76 = vcmask 257024
    %v77 = vsel %vm76, %v68, -inf
    %78 = vmax.xlane.f32.xlu0 %v77
    %v79 = vpop.xlane.xlu0 %78
    %v80 = vsel %vm76, %v69, -inf
    %81 = vmax.xlane.f32.xlu0 %v80
    %v82 = vpop.xlane.xlu0 %81
    %v83 = vsel %vm76, %v70, -inf
    %84 = vmax.xlane.f32.xlu0 %v83
    %v85 = vpop.xlane.xlu0 %84
    %v86 = vsel %vm76, %v71, -inf
    %87 = vmax.xlane.f32.xlu0 %v86
    %v88 = vpop.xlane.xlu0 %87
    %v89 = vsel %vm76, %v72, -inf
    %90 = vmax.xlane.f32.xlu0 %v89
    %v91 = vpop.xlane.xlu0 %90
    %v92 = vsel %vm76, %v73, -inf
    %93 = vmax.xlane.f32.xlu0 %v92
    %v94 = vpop.xlane.xlu0 %93
    %v95 = vsel %vm76, %v74, -inf
    %96 = vmax.xlane.f32.xlu0 %v95
    %v97 = vpop.xlane.xlu0 %96
    %v98 = vsel %vm76, %v75, -inf
    %99 = vmax.xlane.f32.xlu0 %v98
    %v100 = vpop.xlane.xlu0 %99
    %vm101 = vcmask 1043456
    %v102 = vsel %vm101, %v79, -inf
    %v103 = vrot.slane %v102, 4
    %v104 = vmax.f32 %v102, %v103
    %v105 = vrot.slane %v104, 2
    %v106 = vmax.f32 %v104, %v105
    %v107 = vrot.slane %v106, 1
    %v108 = vmax.f32 %v106, %v107
    %v109 = vsel %vm101, %v82, -inf
    %v110 = vrot.slane %v109, 4
    %v111 = vmax.f32 %v109, %v110
    %v112 = vrot.slane %v111, 2
    %v113 = vmax.f32 %v111, %v112
    %v114 = vrot.slane %v113, 1
    %v115 = vmax.f32 %v113, %v114
    %v116 = vsel %vm101, %v85, -inf
    %v117 = vrot.slane %v116, 4
    %v118 = vmax.f32 %v116, %v117
    %v119 = vrot.slane %v118, 2
    %v120 = vmax.f32 %v118, %v119
    %v121 = vrot.slane %v120, 1
    %v122 = vmax.f32 %v120, %v121
    %v123 = vsel %vm101, %v88, -inf
    %v124 = vrot.slane %v123, 4
    %v125 = vmax.f32 %v123, %v124
    %v126 = vrot.slane %v125, 2
    %v127 = vmax.f32 %v125, %v126
    %v128 = vrot.slane %v127, 1
    %v129 = vmax.f32 %v127, %v128
    %v130 = vsel %vm101, %v91, -inf
    %v131 = vrot.slane %v130, 4
    %v132 = vmax.f32 %v130, %v131
    %v133 = vrot.slane %v132, 2
    %v134 = vmax.f32 %v132, %v133
    %v135 = vrot.slane %v134, 1
    %v136 = vmax.f32 %v134, %v135
    %v137 = vsel %vm101, %v94, -inf
    %v138 = vrot.slane %v137, 4
    %v139 = vmax.f32 %v137, %v138
    %v140 = vrot.slane %v139, 2
    %v141 = vmax.f32 %v139, %v140
    %v142 = vrot.slane %v141, 1
    %v143 = vmax.f32 %v141, %v142
    %v144 = vsel %vm101, %v97, -inf
    %v145 = vrot.slane %v144, 4
    %v146 = vmax.f32 %v144, %v145
    %v147 = vrot.slane %v146, 2
    %v148 = vmax.f32 %v146, %v147
    %v149 = vrot.slane %v148, 1
    %v150 = vmax.f32 %v148, %v149
    %v151 = vsel %vm101, %v100, -inf
    %v152 = vrot.slane %v151, 4
    %v153 = vmax.f32 %v151, %v152
    %v154 = vrot.slane %v153, 2
    %v155 = vmax.f32 %v153, %v154
    %v156 = vrot.slane %v155, 1
    %v157 = vmax.f32 %v155, %v156
    %v158 = vadd.f32 %v108, 1e-12
    %v159 = vadd.f32 %v115, 1e-12
    %v160 = vadd.f32 %v122, 1e-12
    %v161 = vadd.f32 %v129, 1e-12
    %v162 = vadd.f32 %v136, 1e-12
    %v163 = vadd.f32 %v143, 1e-12
    %v164 = vadd.f32 %v150, 1e-12
    %v165 = vadd.f32 %v157, 1e-12
    %v166 = vrcp.pop %v158
    %v167 = vmul.f32 %v60, %v166
    %v168 = vrcp.pop %v159
    %v169 = vmul.f32 %v61, %v168
    %v170 = vrcp.pop %v160
    %v171 = vmul.f32 %v62, %v170
    %v172 = vrcp.pop %v161
    %v173 = vmul.f32 %v63, %v172
    %v174 = vrcp.pop %v162
    %v175 = vmul.f32 %v64, %v174
    %v176 = vrcp.pop %v163
    %v177 = vmul.f32 %v65, %v176
    %v178 = vrcp.pop %v164
    %v179 = vmul.f32 %v66, %v178
    %v180 = vrcp.pop %v165
    %v181 = vmul.f32 %v67, %v180
    %v182 = vmul.f32 %v167, %v167
    %v183 = vmul.f32 %v169, %v169
    %v184 = vmul.f32 %v171, %v171
    %v185 = vmul.f32 %v173, %v173
    %v186 = vmul.f32 %v175, %v175
    %v187 = vmul.f32 %v177, %v177
    %v188 = vmul.f32 %v179, %v179
    %v189 = vmul.f32 %v181, %v181
    %v190 = vsel %vm76, %v182, 0.0
    %191 = vadd.xlane.f32.xlu0 %v190
    %v192 = vpop.xlane.xlu0 %191
    %v193 = vsel %vm76, %v183, 0.0
    %194 = vadd.xlane.f32.xlu0 %v193
    %v195 = vpop.xlane.xlu0 %194
    %v196 = vsel %vm76, %v184, 0.0
    %197 = vadd.xlane.f32.xlu0 %v196
    %v198 = vpop.xlane.xlu0 %197
    %v199 = vsel %vm76, %v185, 0.0
    %200 = vadd.xlane.f32.xlu0 %v199
    %v201 = vpop.xlane.xlu0 %200
    %v202 = vsel %vm76, %v186, 0.0
    %203 = vadd.xlane.f32.xlu0 %v202
    %v204 = vpop.xlane.xlu0 %203
    %v205 = vsel %vm76, %v187, 0.0
    %206 = vadd.xlane.f32.xlu0 %v205
    %v207 = vpop.xlane.xlu0 %206
    %v208 = vsel %vm76, %v188, 0.0
    %209 = vadd.xlane.f32.xlu0 %v208
    %v210 = vpop.xlane.xlu0 %209
    %v211 = vsel %vm76, %v189, 0.0
    %212 = vadd.xlane.f32.xlu0 %v211
    %v213 = vpop.xlane.xlu0 %212
    %v214 = vsel %vm101, %v192, 0.0
    %v215 = vrot.slane %v214, 4
    %v216 = vadd.f32 %v214, %v215
    %v217 = vrot.slane %v216, 2
    %v218 = vadd.f32 %v216, %v217
    %v219 = vrot.slane %v218, 1
    %v220 = vadd.f32 %v218, %v219
    %v221 = vsel %vm101, %v195, 0.0
    %v222 = vrot.slane %v221, 4
    %v223 = vadd.f32 %v221, %v222
    %v224 = vrot.slane %v223, 2
    %v225 = vadd.f32 %v223, %v224
    %v226 = vrot.slane %v225, 1
    %v227 = vadd.f32 %v225, %v226
    %v228 = vsel %vm101, %v198, 0.0
    %v229 = vrot.slane %v228, 4
    %v230 = vadd.f32 %v228, %v229
    %v231 = vrot.slane %v230, 2
    %v232 = vadd.f32 %v230, %v231
    %v233 = vrot.slane %v232, 1
    %v234 = vadd.f32 %v232, %v233
    %v235 = vsel %vm101, %v201, 0.0
    %v236 = vrot.slane %v235, 4
    %v237 = vadd.f32 %v235, %v236
    %v238 = vrot.slane %v237, 2
    %v239 = vadd.f32 %v237, %v238
    %v240 = vrot.slane %v239, 1
    %v241 = vadd.f32 %v239, %v240
    %v242 = vsel %vm101, %v204, 0.0
    %v243 = vrot.slane %v242, 4
    %v244 = vadd.f32 %v242, %v243
    %v245 = vrot.slane %v244, 2
    %v246 = vadd.f32 %v244, %v245
    %v247 = vrot.slane %v246, 1
    %v248 = vadd.f32 %v246, %v247
    %v249 = vsel %vm101, %v207, 0.0
    %v250 = vrot.slane %v249, 4
    %v251 = vadd.f32 %v249, %v250
    %v252 = vrot.slane %v251, 2
    %v253 = vadd.f32 %v251, %v252
    %v254 = vrot.slane %v253, 1
    %v255 = vadd.f32 %v253, %v254
    %v256 = vsel %vm101, %v210, 0.0
    %v257 = vrot.slane %v256, 4
    %v258 = vadd.f32 %v256, %v257
    %v259 = vrot.slane %v258, 2
    %v260 = vadd.f32 %v258, %v259
    %v261 = vrot.slane %v260, 1
    %v262 = vadd.f32 %v260, %v261
    %v263 = vsel %vm101, %v213, 0.0
    %v264 = vrot.slane %v263, 4
    %v265 = vadd.f32 %v263, %v264
    %v266 = vrot.slane %v265, 2
    %v267 = vadd.f32 %v265, %v266
    %v268 = vrot.slane %v267, 1
    %v269 = vadd.f32 %v267, %v268
    %v270 = vadd.f32 %v220, 1e-06
    %v271 = vadd.f32 %v227, 1e-06
    %v272 = vadd.f32 %v234, 1e-06
    %v273 = vadd.f32 %v241, 1e-06
    %v274 = vadd.f32 %v248, 1e-06
    %v275 = vadd.f32 %v255, 1e-06
    %v276 = vadd.f32 %v262, 1e-06
    %v277 = vadd.f32 %v269, 1e-06
    %v278 = vrsqrt.pop %v270
    %v279 = vmul.f32 %v270, %v278
    %vm280 = vcmp.eq.f32.partialorder %v270, inf
    %v281 = vsel %vm280, %v270, %v279
    %vm282 = vcmp.eq.f32.partialorder %v270, 0.0
    %v283 = vand.u32 %v270, 2147483648
    %v284 = vsel %vm282, %v283, %v281
    %v285 = vrsqrt.pop %v271
    %v286 = vmul.f32 %v271, %v285
    %vm287 = vcmp.eq.f32.partialorder %v271, inf
    %v288 = vsel %vm287, %v271, %v286
    %vm289 = vcmp.eq.f32.partialorder %v271, 0.0
    %v290 = vand.u32 %v271, 2147483648
    %v291 = vsel %vm289, %v290, %v288
    %v292 = vrsqrt.pop %v272
    %v293 = vmul.f32 %v272, %v292
    %vm294 = vcmp.eq.f32.partialorder %v272, inf
    %v295 = vsel %vm294, %v272, %v293
    %vm296 = vcmp.eq.f32.partialorder %v272, 0.0
    %v297 = vand.u32 %v272, 2147483648
    %v298 = vsel %vm296, %v297, %v295
    %v299 = vrsqrt.pop %v273
    %v300 = vmul.f32 %v273, %v299
    %vm301 = vcmp.eq.f32.partialorder %v273, inf
    %v302 = vsel %vm301, %v273, %v300
    %vm303 = vcmp.eq.f32.partialorder %v273, 0.0
    %v304 = vand.u32 %v273, 2147483648
    %v305 = vsel %vm303, %v304, %v302
    %v306 = vrsqrt.pop %v274
    %v307 = vmul.f32 %v274, %v306
    %vm308 = vcmp.eq.f32.partialorder %v274, inf
    %v309 = vsel %vm308, %v274, %v307
    %vm310 = vcmp.eq.f32.partialorder %v274, 0.0
    %v311 = vand.u32 %v274, 2147483648
    %v312 = vsel %vm310, %v311, %v309
    %v313 = vrsqrt.pop %v275
    %v314 = vmul.f32 %v275, %v313
    %vm315 = vcmp.eq.f32.partialorder %v275, inf
    %v316 = vsel %vm315, %v275, %v314
    %vm317 = vcmp.eq.f32.partialorder %v275, 0.0
    %v318 = vand.u32 %v275, 2147483648
    %v319 = vsel %vm317, %v318, %v316
    %v320 = vrsqrt.pop %v276
    %v321 = vmul.f32 %v276, %v320
    %vm322 = vcmp.eq.f32.partialorder %v276, inf
    %v323 = vsel %vm322, %v276, %v321
    %vm324 = vcmp.eq.f32.partialorder %v276, 0.0
    %v325 = vand.u32 %v276, 2147483648
    %v326 = vsel %vm324, %v325, %v323
    %v327 = vrsqrt.pop %v277
    %v328 = vmul.f32 %v277, %v327
    %vm329 = vcmp.eq.f32.partialorder %v277, inf
    %v330 = vsel %vm329, %v277, %v328
    %vm331 = vcmp.eq.f32.partialorder %v277, 0.0
    %v332 = vand.u32 %v277, 2147483648
    %v333 = vsel %vm331, %v332, %v330
    %v334 = vrcp.pop %v284
    %v335 = vmul.f32 %v167, %v334
    %v336 = vrcp.pop %v291
    %v337 = vmul.f32 %v169, %v336
    %v338 = vrcp.pop %v298
    %v339 = vmul.f32 %v171, %v338
    %v340 = vrcp.pop %v305
    %v341 = vmul.f32 %v173, %v340
    %v342 = vrcp.pop %v312
    %v343 = vmul.f32 %v175, %v342
    %v344 = vrcp.pop %v319
    %v345 = vmul.f32 %v177, %v344
    %v346 = vrcp.pop %v326
    %v347 = vmul.f32 %v179, %v346
    %v348 = vrcp.pop %v333
    %v349 = vmul.f32 %v181, %v348
    %v350 = vmul.f32 %v335, 0.5
    %v351 = vmul.f32 %v337, 0.5
    %v352 = vmul.f32 %v339, 0.5
    %v353 = vmul.f32 %v341, 0.5
    %v354 = vmul.f32 %v343, 0.5
    %v355 = vmul.f32 %v345, 0.5
    %v356 = vmul.f32 %v347, 0.5
    %v357 = vmul.f32 %v349, 0.5
    %v358 = vadd.f32 %v27, %v350
    %v359 = vadd.f32 %v28, %v351
    %v360 = vadd.f32 %v29, %v352
    %v361 = vadd.f32 %v30, %v353
    %v362 = vadd.f32 %v31, %v354
    %v363 = vadd.f32 %v32, %v355
    %v364 = vadd.f32 %v33, %v356
    %v365 = vadd.f32 %v34, %v357
    %v366 = vmul.f32 %v358, %v35
    %v367 = vmul.f32 %v359, %v36
    %v368 = vmul.f32 %v360, %v37
    %v369 = vmul.f32 %v361, %v38
    %v370 = vmul.f32 %v362, %v39
    %v371 = vmul.f32 %v363, %v40
    %v372 = vmul.f32 %v364, %v41
    %v373 = vmul.f32 %v365, %v42
    %v374 = vsel %vm76, %v366, 0.0
    %v375 = vsel %vm76, %v367, 0.0
    %v376 = vadd.f32 %v374, %v375
    %v377 = vsel %vm76, %v368, 0.0
    %v378 = vadd.f32 %v376, %v377
    %v379 = vsel %vm76, %v369, 0.0
    %v380 = vadd.f32 %v378, %v379
    %v381 = vsel %vm76, %v370, 0.0
    %v382 = vadd.f32 %v380, %v381
    %v383 = vsel %vm76, %v371, 0.0
    %v384 = vadd.f32 %v382, %v383
    %v385 = vsel %vm76, %v372, 0.0
    %v386 = vadd.f32 %v384, %v385
    %v387 = vsel %vm76, %v373, 0.0
    %v388 = vadd.f32 %v386, %v387
    %v389 = vld [vmem:[%s3] sm:$0x1]
    %391 = vset.pattern.permute.xlu0 0
    %392 = vperm.xlu0 %391, %v388
    %v393 = vpop.permute.xlu0 %392
    %v395 = vlaneseq
    %v396 = vshrl.u32 %v395, 7
    %v397 = vsub.s32 0, %v396
    %v398 = vrot.slane %v389, %v397
    %v399 = vmul.f32 %v393, %v398
    %v400 = vld [vmem:[%s3 + $0x1] sm:$0x1]
    %401 = vset.pattern.permute.xlu0 1
    %402 = vperm.xlu0 %401, %v388
    %v403 = vpop.permute.xlu0 %402
    %v405 = vlaneseq
    %v406 = vshrl.u32 %v405, 7
    %v407 = vsub.s32 0, %v406
    %v408 = vrot.slane %v400, %v407
    %v409 = vmul.f32 %v403, %v408
    %v410 = vadd.f32 %v399, %v409
    %v411 = vld [vmem:[%s3 + $0x2] sm:$0x1]
    %412 = vset.pattern.permute.xlu0 2
    %413 = vperm.xlu0 %412, %v388
    %v414 = vpop.permute.xlu0 %413
    %v416 = vlaneseq
    %v417 = vshrl.u32 %v416, 7
    %v418 = vsub.s32 0, %v417
    %v419 = vrot.slane %v411, %v418
    %v420 = vmul.f32 %v414, %v419
    %v421 = vadd.f32 %v410, %v420
    %v422 = vld [vmem:[%s3 + $0x3] sm:$0x1]
    %423 = vset.pattern.permute.xlu0 3
    %424 = vperm.xlu0 %423, %v388
    %v425 = vpop.permute.xlu0 %424
    %v427 = vlaneseq
    %v428 = vshrl.u32 %v427, 7
    %v429 = vsub.s32 0, %v428
    %v430 = vrot.slane %v422, %v429
    %v431 = vmul.f32 %v425, %v430
    %v432 = vadd.f32 %v421, %v431
    %v433 = vld [vmem:[%s3 + $0x4] sm:$0x1]
    %434 = vset.pattern.permute.xlu0 4
    %435 = vperm.xlu0 %434, %v388
    %v436 = vpop.permute.xlu0 %435
    %v438 = vlaneseq
    %v439 = vshrl.u32 %v438, 7
    %v440 = vsub.s32 0, %v439
    %v441 = vrot.slane %v433, %v440
    %v442 = vmul.f32 %v436, %v441
    %v443 = vadd.f32 %v432, %v442
    %v444 = vld [vmem:[%s3 + $0x5] sm:$0x1]
    %445 = vset.pattern.permute.xlu0 5
    %446 = vperm.xlu0 %445, %v388
    %v447 = vpop.permute.xlu0 %446
    %v449 = vlaneseq
    %v450 = vshrl.u32 %v449, 7
    %v451 = vsub.s32 0, %v450
    %v452 = vrot.slane %v444, %v451
    %v453 = vmul.f32 %v447, %v452
    %v454 = vadd.f32 %v443, %v453
    %v455 = vld [vmem:[%s3 + $0x6] sm:$0x1]
    %456 = vset.pattern.permute.xlu0 6
    %457 = vperm.xlu0 %456, %v388
    %v458 = vpop.permute.xlu0 %457
    %v460 = vlaneseq
    %v461 = vshrl.u32 %v460, 7
    %v462 = vsub.s32 0, %v461
    %v463 = vrot.slane %v455, %v462
    %v464 = vmul.f32 %v458, %v463
    %v465 = vadd.f32 %v454, %v464
    %v466 = vld [vmem:[%s3 + $0x7] sm:$0x1]
    %467 = vset.pattern.permute.xlu0 7
    %468 = vperm.xlu0 %467, %v388
    %v469 = vpop.permute.xlu0 %468
    %v471 = vlaneseq
    %v472 = vshrl.u32 %v471, 7
    %v473 = vsub.s32 0, %v472
    %v474 = vrot.slane %v466, %v473
    %v475 = vmul.f32 %v469, %v474
    %v476 = vadd.f32 %v465, %v475
    %v477 = vld [vmem:[%s3 + $0x8] sm:$0x1]
    %478 = vset.pattern.permute.xlu0 8
    %479 = vperm.xlu0 %478, %v388
    %v480 = vpop.permute.xlu0 %479
    %v482 = vlaneseq
    %v483 = vshrl.u32 %v482, 7
    %v484 = vsub.s32 0, %v483
    %v485 = vrot.slane %v477, %v484
    %v486 = vmul.f32 %v480, %v485
    %v487 = vadd.f32 %v476, %v486
    %v488 = vld [vmem:[%s3 + $0x9] sm:$0x1]
    %489 = vset.pattern.permute.xlu0 9
    %490 = vperm.xlu0 %489, %v388
    %v491 = vpop.permute.xlu0 %490
    %v493 = vlaneseq
    %v494 = vshrl.u32 %v493, 7
    %v495 = vsub.s32 0, %v494
    %v496 = vrot.slane %v488, %v495
    %v497 = vmul.f32 %v491, %v496
    %v498 = vadd.f32 %v487, %v497
    %v499 = vld [vmem:[%s3 + $0xa] sm:$0x1]
    %500 = vset.pattern.permute.xlu0 10
    %501 = vperm.xlu0 %500, %v388
    %v502 = vpop.permute.xlu0 %501
    %v504 = vlaneseq
    %v505 = vshrl.u32 %v504, 7
    %v506 = vsub.s32 0, %v505
    %v507 = vrot.slane %v499, %v506
    %v508 = vmul.f32 %v502, %v507
    %v509 = vadd.f32 %v498, %v508
    %v510 = vld [vmem:[%s3 + $0xb] sm:$0x1]
    %511 = vset.pattern.permute.xlu0 11
    %512 = vperm.xlu0 %511, %v388
    %v513 = vpop.permute.xlu0 %512
    %v515 = vlaneseq
    %v516 = vshrl.u32 %v515, 7
    %v517 = vsub.s32 0, %v516
    %v518 = vrot.slane %v510, %v517
    %v519 = vmul.f32 %v513, %v518
    %v520 = vadd.f32 %v509, %v519
    %v521 = vld [vmem:[%s3 + $0xc] sm:$0x1]
    %522 = vset.pattern.permute.xlu0 12
    %523 = vperm.xlu0 %522, %v388
    %v524 = vpop.permute.xlu0 %523
    %v526 = vlaneseq
    %v527 = vshrl.u32 %v526, 7
    %v528 = vsub.s32 0, %v527
    %v529 = vrot.slane %v521, %v528
    %v530 = vmul.f32 %v524, %v529
    %v531 = vadd.f32 %v520, %v530
    %v532 = vld [vmem:[%s3 + $0xd] sm:$0x1]
    %533 = vset.pattern.permute.xlu0 13
    %534 = vperm.xlu0 %533, %v388
    %v535 = vpop.permute.xlu0 %534
    %v537 = vlaneseq
    %v538 = vshrl.u32 %v537, 7
    %v539 = vsub.s32 0, %v538
    %v540 = vrot.slane %v532, %v539
    %v541 = vmul.f32 %v535, %v540
    %v542 = vadd.f32 %v531, %v541
    %v543 = vld [vmem:[%s3 + $0xe] sm:$0x1]
    %544 = vset.pattern.permute.xlu0 14
    %545 = vperm.xlu0 %544, %v388
    %v546 = vpop.permute.xlu0 %545
    %v548 = vlaneseq
    %v549 = vshrl.u32 %v548, 7
    %v550 = vsub.s32 0, %v549
    %v551 = vrot.slane %v543, %v550
    %v552 = vmul.f32 %v546, %v551
    %v553 = vadd.f32 %v542, %v552
    %v554 = vld [vmem:[%s3 + $0xf] sm:$0x1]
    %555 = vset.pattern.permute.xlu0 15
    %556 = vperm.xlu0 %555, %v388
    %v557 = vpop.permute.xlu0 %556
    %v559 = vlaneseq
    %v560 = vshrl.u32 %v559, 7
    %v561 = vsub.s32 0, %v560
    %v562 = vrot.slane %v554, %v561
    %v563 = vmul.f32 %v557, %v562
    %v564 = vadd.f32 %v553, %v563
    %v565 = vld [vmem:[%s3 + $0x10] sm:$0x1]
    %566 = vset.pattern.permute.xlu0 16
    %567 = vperm.xlu0 %566, %v388
    %v568 = vpop.permute.xlu0 %567
    %v570 = vlaneseq
    %v571 = vshrl.u32 %v570, 7
    %v572 = vsub.s32 0, %v571
    %v573 = vrot.slane %v565, %v572
    %v574 = vmul.f32 %v568, %v573
    %v575 = vadd.f32 %v564, %v574
    %v576 = vld [vmem:[%s3 + $0x11] sm:$0x1]
    %577 = vset.pattern.permute.xlu0 17
    %578 = vperm.xlu0 %577, %v388
    %v579 = vpop.permute.xlu0 %578
    %v581 = vlaneseq
    %v582 = vshrl.u32 %v581, 7
    %v583 = vsub.s32 0, %v582
    %v584 = vrot.slane %v576, %v583
    %v585 = vmul.f32 %v579, %v584
    %v586 = vadd.f32 %v575, %v585
    %v587 = vld [vmem:[%s3 + $0x12] sm:$0x1]
    %588 = vset.pattern.permute.xlu0 18
    %589 = vperm.xlu0 %588, %v388
    %v590 = vpop.permute.xlu0 %589
    %v592 = vlaneseq
    %v593 = vshrl.u32 %v592, 7
    %v594 = vsub.s32 0, %v593
    %v595 = vrot.slane %v587, %v594
    %v596 = vmul.f32 %v590, %v595
    %v597 = vadd.f32 %v586, %v596
    %v598 = vld [vmem:[%s3 + $0x13] sm:$0x1]
    %599 = vset.pattern.permute.xlu0 19
    %600 = vperm.xlu0 %599, %v388
    %v601 = vpop.permute.xlu0 %600
    %v603 = vlaneseq
    %v604 = vshrl.u32 %v603, 7
    %v605 = vsub.s32 0, %v604
    %v606 = vrot.slane %v598, %v605
    %v607 = vmul.f32 %v601, %v606
    %v608 = vadd.f32 %v597, %v607
    %v609 = vld [vmem:[%s3 + $0x14] sm:$0x1]
    %610 = vset.pattern.permute.xlu0 20
    %611 = vperm.xlu0 %610, %v388
    %v612 = vpop.permute.xlu0 %611
    %v614 = vlaneseq
    %v615 = vshrl.u32 %v614, 7
    %v616 = vsub.s32 0, %v615
    %v617 = vrot.slane %v609, %v616
    %v618 = vmul.f32 %v612, %v617
    %v619 = vadd.f32 %v608, %v618
    %v620 = vld [vmem:[%s3 + $0x15] sm:$0x1]
    %621 = vset.pattern.permute.xlu0 21
    %622 = vperm.xlu0 %621, %v388
    %v623 = vpop.permute.xlu0 %622
    %v625 = vlaneseq
    %v626 = vshrl.u32 %v625, 7
    %v627 = vsub.s32 0, %v626
    %v628 = vrot.slane %v620, %v627
    %v629 = vmul.f32 %v623, %v628
    %v630 = vadd.f32 %v619, %v629
    %v631 = vld [vmem:[%s3 + $0x16] sm:$0x1]
    %632 = vset.pattern.permute.xlu0 22
    %633 = vperm.xlu0 %632, %v388
    %v634 = vpop.permute.xlu0 %633
    %v636 = vlaneseq
    %v637 = vshrl.u32 %v636, 7
    %v638 = vsub.s32 0, %v637
    %v639 = vrot.slane %v631, %v638
    %v640 = vmul.f32 %v634, %v639
    %v641 = vadd.f32 %v630, %v640
    %v642 = vld [vmem:[%s3 + $0x17] sm:$0x1]
    %643 = vset.pattern.permute.xlu0 23
    %644 = vperm.xlu0 %643, %v388
    %v645 = vpop.permute.xlu0 %644
    %v647 = vlaneseq
    %v648 = vshrl.u32 %v647, 7
    %v649 = vsub.s32 0, %v648
    %v650 = vrot.slane %v642, %v649
    %v651 = vmul.f32 %v645, %v650
    %v652 = vadd.f32 %v641, %v651
    %v653 = vld [vmem:[%s3 + $0x18] sm:$0x1]
    %654 = vset.pattern.permute.xlu0 24
    %655 = vperm.xlu0 %654, %v388
    %v656 = vpop.permute.xlu0 %655
    %v658 = vlaneseq
    %v659 = vshrl.u32 %v658, 7
    %v660 = vsub.s32 0, %v659
    %v661 = vrot.slane %v653, %v660
    %v662 = vmul.f32 %v656, %v661
    %v663 = vadd.f32 %v652, %v662
    %v664 = vld [vmem:[%s3 + $0x19] sm:$0x1]
    %665 = vset.pattern.permute.xlu0 25
    %666 = vperm.xlu0 %665, %v388
    %v667 = vpop.permute.xlu0 %666
    %v669 = vlaneseq
    %v670 = vshrl.u32 %v669, 7
    %v671 = vsub.s32 0, %v670
    %v672 = vrot.slane %v664, %v671
    %v673 = vmul.f32 %v667, %v672
    %v674 = vadd.f32 %v663, %v673
    %v675 = vld [vmem:[%s3 + $0x1a] sm:$0x1]
    %676 = vset.pattern.permute.xlu0 26
    %677 = vperm.xlu0 %676, %v388
    %v678 = vpop.permute.xlu0 %677
    %v680 = vlaneseq
    %v681 = vshrl.u32 %v680, 7
    %v682 = vsub.s32 0, %v681
    %v683 = vrot.slane %v675, %v682
    %v684 = vmul.f32 %v678, %v683
    %v685 = vadd.f32 %v674, %v684
    %v686 = vld [vmem:[%s3 + $0x1b] sm:$0x1]
    %687 = vset.pattern.permute.xlu0 27
    %688 = vperm.xlu0 %687, %v388
    %v689 = vpop.permute.xlu0 %688
    %v691 = vlaneseq
    %v692 = vshrl.u32 %v691, 7
    %v693 = vsub.s32 0, %v692
    %v694 = vrot.slane %v686, %v693
    %v695 = vmul.f32 %v689, %v694
    %v696 = vadd.f32 %v685, %v695
    %v697 = vld [vmem:[%s3 + $0x1c] sm:$0x1]
    %698 = vset.pattern.permute.xlu0 28
    %699 = vperm.xlu0 %698, %v388
    %v700 = vpop.permute.xlu0 %699
    %v702 = vlaneseq
    %v703 = vshrl.u32 %v702, 7
    %v704 = vsub.s32 0, %v703
    %v705 = vrot.slane %v697, %v704
    %v706 = vmul.f32 %v700, %v705
    %v707 = vadd.f32 %v696, %v706
    %v708 = vld [vmem:[%s3 + $0x1d] sm:$0x1]
    %709 = vset.pattern.permute.xlu0 29
    %710 = vperm.xlu0 %709, %v388
    %v711 = vpop.permute.xlu0 %710
    %v713 = vlaneseq
    %v714 = vshrl.u32 %v713, 7
    %v715 = vsub.s32 0, %v714
    %v716 = vrot.slane %v708, %v715
    %v717 = vmul.f32 %v711, %v716
    %v718 = vadd.f32 %v707, %v717
    %v719 = vld [vmem:[%s3 + $0x1e] sm:$0x1]
    %720 = vset.pattern.permute.xlu0 30
    %721 = vperm.xlu0 %720, %v388
    %v722 = vpop.permute.xlu0 %721
    %v724 = vlaneseq
    %v725 = vshrl.u32 %v724, 7
    %v726 = vsub.s32 0, %v725
    %v727 = vrot.slane %v719, %v726
    %v728 = vmul.f32 %v722, %v727
    %v729 = vadd.f32 %v718, %v728
    %v730 = vld [vmem:[%s3 + $0x1f] sm:$0x1]
    %731 = vset.pattern.permute.xlu0 31
    %732 = vperm.xlu0 %731, %v388
    %v733 = vpop.permute.xlu0 %732
    %v735 = vlaneseq
    %v736 = vshrl.u32 %v735, 7
    %v737 = vsub.s32 0, %v736
    %v738 = vrot.slane %v730, %v737
    %v739 = vmul.f32 %v733, %v738
    %v740 = vadd.f32 %v729, %v739
    %v742 = vlaneseq
    %v743 = vshrl.u32 %v742, 7
    %v744 = vsub.s32 0, %v743
    %v745 = vrot.slane %v44, %v744
    %v747 = vadd.f32 %v740, %v745
    %v748 = vsel %vm45, %v747, -inf
    %749 = vmax.xlane.f32.xlu0 %v748
    %v750 = vpop.xlane.xlu0 %749
    %v751 = vsub.f32 %v747, %v750
    %v752 = vmul.f32 %v751, 1.442695
    %v753 = vpow.pop %v752
    %v754 = vsel %vm45, %v753, 0.0
    %755 = vadd.xlane.f32.xlu0 %v754
    %v756 = vpop.xlane.xlu0 %755
    %v757 = vrcp.pop %v756
    %v758 = vmul.f32 %v753, %v757
    %v759 = vsub.f32 %v758, %v56
    %v760 = vmul.f32 %v759, 0.25
    %v761 = vld [vmem:[%s4] sm:$0x1]
    %763 = vset.pattern.permute.xlu0 0
    %764 = vperm.xlu0 %763, %v760
    %v765 = vpop.permute.xlu0 %764
    %v767 = vlaneseq
    %v768 = vshrl.u32 %v767, 7
    %v769 = vsub.s32 0, %v768
    %v770 = vrot.slane %v761, %v769
    %v771 = vmul.f32 %v765, %v770
    %v772 = vld [vmem:[%s4 + $0x1] sm:$0x1]
    %773 = vset.pattern.permute.xlu0 1
    %774 = vperm.xlu0 %773, %v760
    %v775 = vpop.permute.xlu0 %774
    %v777 = vlaneseq
    %v778 = vshrl.u32 %v777, 7
    %v779 = vsub.s32 0, %v778
    %v780 = vrot.slane %v772, %v779
    %v781 = vmul.f32 %v775, %v780
    %v782 = vadd.f32 %v771, %v781
    %v783 = vld [vmem:[%s4 + $0x2] sm:$0x1]
    %784 = vset.pattern.permute.xlu0 2
    %785 = vperm.xlu0 %784, %v760
    %v786 = vpop.permute.xlu0 %785
    %v788 = vlaneseq
    %v789 = vshrl.u32 %v788, 7
    %v790 = vsub.s32 0, %v789
    %v791 = vrot.slane %v783, %v790
    %v792 = vmul.f32 %v786, %v791
    %v793 = vadd.f32 %v782, %v792
    %v794 = vld [vmem:[%s4 + $0x3] sm:$0x1]
    %795 = vset.pattern.permute.xlu0 3
    %796 = vperm.xlu0 %795, %v760
    %v797 = vpop.permute.xlu0 %796
    %v799 = vlaneseq
    %v800 = vshrl.u32 %v799, 7
    %v801 = vsub.s32 0, %v800
    %v802 = vrot.slane %v794, %v801
    %v803 = vmul.f32 %v797, %v802
    %v804 = vadd.f32 %v793, %v803
    %v805 = vld [vmem:[%s4 + $0x4] sm:$0x1]
    %806 = vset.pattern.permute.xlu0 4
    %807 = vperm.xlu0 %806, %v760
    %v808 = vpop.permute.xlu0 %807
    %v810 = vlaneseq
    %v811 = vshrl.u32 %v810, 7
    %v812 = vsub.s32 0, %v811
    %v813 = vrot.slane %v805, %v812
    %v814 = vmul.f32 %v808, %v813
    %v815 = vadd.f32 %v804, %v814
    %v816 = vld [vmem:[%s4 + $0x5] sm:$0x1]
    %817 = vset.pattern.permute.xlu0 5
    %818 = vperm.xlu0 %817, %v760
    %v819 = vpop.permute.xlu0 %818
    %v821 = vlaneseq
    %v822 = vshrl.u32 %v821, 7
    %v823 = vsub.s32 0, %v822
    %v824 = vrot.slane %v816, %v823
    %v825 = vmul.f32 %v819, %v824
    %v826 = vadd.f32 %v815, %v825
    %v827 = vld [vmem:[%s4 + $0x6] sm:$0x1]
    %828 = vset.pattern.permute.xlu0 6
    %829 = vperm.xlu0 %828, %v760
    %v830 = vpop.permute.xlu0 %829
    %v832 = vlaneseq
    %v833 = vshrl.u32 %v832, 7
    %v834 = vsub.s32 0, %v833
    %v835 = vrot.slane %v827, %v834
    %v836 = vmul.f32 %v830, %v835
    %v837 = vadd.f32 %v826, %v836
    %v838 = vld [vmem:[%s4 + $0x7] sm:$0x1]
    %839 = vset.pattern.permute.xlu0 7
    %840 = vperm.xlu0 %839, %v760
    %v841 = vpop.permute.xlu0 %840
    %v843 = vlaneseq
    %v844 = vshrl.u32 %v843, 7
    %v845 = vsub.s32 0, %v844
    %v846 = vrot.slane %v838, %v845
    %v847 = vmul.f32 %v841, %v846
    %v848 = vadd.f32 %v837, %v847
    %v849 = vmul.f32 %v35, %v848
    %v850 = vmul.f32 %v36, %v848
    %v851 = vmul.f32 %v37, %v848
    %v852 = vmul.f32 %v38, %v848
    %v853 = vmul.f32 %v39, %v848
    %v854 = vmul.f32 %v40, %v848
    %v855 = vmul.f32 %v41, %v848
    %v856 = vmul.f32 %v42, %v848
    %v857 = vand.u32 2147483647, %v849
    %v858 = vand.u32 2147483647, %v850
    %v859 = vand.u32 2147483647, %v851
    %v860 = vand.u32 2147483647, %v852
    %v861 = vand.u32 2147483647, %v853
    %v862 = vand.u32 2147483647, %v854
    %v863 = vand.u32 2147483647, %v855
    %v864 = vand.u32 2147483647, %v856
    %v865 = vsel %vm76, %v857, -inf
    %866 = vmax.xlane.f32.xlu0 %v865
    %v867 = vpop.xlane.xlu0 %866
    %v868 = vsel %vm76, %v858, -inf
    %869 = vmax.xlane.f32.xlu0 %v868
    %v870 = vpop.xlane.xlu0 %869
    %v871 = vsel %vm76, %v859, -inf
    %872 = vmax.xlane.f32.xlu0 %v871
    %v873 = vpop.xlane.xlu0 %872
    %v874 = vsel %vm76, %v860, -inf
    %875 = vmax.xlane.f32.xlu0 %v874
    %v876 = vpop.xlane.xlu0 %875
    %v877 = vsel %vm76, %v861, -inf
    %878 = vmax.xlane.f32.xlu0 %v877
    %v879 = vpop.xlane.xlu0 %878
    %v880 = vsel %vm76, %v862, -inf
    %881 = vmax.xlane.f32.xlu0 %v880
    %v882 = vpop.xlane.xlu0 %881
    %v883 = vsel %vm76, %v863, -inf
    %884 = vmax.xlane.f32.xlu0 %v883
    %v885 = vpop.xlane.xlu0 %884
    %v886 = vsel %vm76, %v864, -inf
    %887 = vmax.xlane.f32.xlu0 %v886
    %v888 = vpop.xlane.xlu0 %887
    %v889 = vsel %vm101, %v867, -inf
    %v890 = vrot.slane %v889, 4
    %v891 = vmax.f32 %v889, %v890
    %v892 = vrot.slane %v891, 2
    %v893 = vmax.f32 %v891, %v892
    %v894 = vrot.slane %v893, 1
    %v895 = vmax.f32 %v893, %v894
    %v896 = vsel %vm101, %v870, -inf
    %v897 = vrot.slane %v896, 4
    %v898 = vmax.f32 %v896, %v897
    %v899 = vrot.slane %v898, 2
    %v900 = vmax.f32 %v898, %v899
    %v901 = vrot.slane %v900, 1
    %v902 = vmax.f32 %v900, %v901
    %v903 = vsel %vm101, %v873, -inf
    %v904 = vrot.slane %v903, 4
    %v905 = vmax.f32 %v903, %v904
    %v906 = vrot.slane %v905, 2
    %v907 = vmax.f32 %v905, %v906
    %v908 = vrot.slane %v907, 1
    %v909 = vmax.f32 %v907, %v908
    %v910 = vsel %vm101, %v876, -inf
    %v911 = vrot.slane %v910, 4
    %v912 = vmax.f32 %v910, %v911
    %v913 = vrot.slane %v912, 2
    %v914 = vmax.f32 %v912, %v913
    %v915 = vrot.slane %v914, 1
    %v916 = vmax.f32 %v914, %v915
    %v917 = vsel %vm101, %v879, -inf
    %v918 = vrot.slane %v917, 4
    %v919 = vmax.f32 %v917, %v918
    %v920 = vrot.slane %v919, 2
    %v921 = vmax.f32 %v919, %v920
    %v922 = vrot.slane %v921, 1
    %v923 = vmax.f32 %v921, %v922
    %v924 = vsel %vm101, %v882, -inf
    %v925 = vrot.slane %v924, 4
    %v926 = vmax.f32 %v924, %v925
    %v927 = vrot.slane %v926, 2
    %v928 = vmax.f32 %v926, %v927
    %v929 = vrot.slane %v928, 1
    %v930 = vmax.f32 %v928, %v929
    %v931 = vsel %vm101, %v885, -inf
    %v932 = vrot.slane %v931, 4
    %v933 = vmax.f32 %v931, %v932
    %v934 = vrot.slane %v933, 2
    %v935 = vmax.f32 %v933, %v934
    %v936 = vrot.slane %v935, 1
    %v937 = vmax.f32 %v935, %v936
    %v938 = vsel %vm101, %v888, -inf
    %v939 = vrot.slane %v938, 4
    %v940 = vmax.f32 %v938, %v939
    %v941 = vrot.slane %v940, 2
    %v942 = vmax.f32 %v940, %v941
    %v943 = vrot.slane %v942, 1
    %v944 = vmax.f32 %v942, %v943
    %v945 = vadd.f32 %v895, 1e-12
    %v946 = vadd.f32 %v902, 1e-12
    %v947 = vadd.f32 %v909, 1e-12
    %v948 = vadd.f32 %v916, 1e-12
    %v949 = vadd.f32 %v923, 1e-12
    %v950 = vadd.f32 %v930, 1e-12
    %v951 = vadd.f32 %v937, 1e-12
    %v952 = vadd.f32 %v944, 1e-12
    %v953 = vrcp.pop %v945
    %v954 = vmul.f32 %v849, %v953
    %v955 = vrcp.pop %v946
    %v956 = vmul.f32 %v850, %v955
    %v957 = vrcp.pop %v947
    %v958 = vmul.f32 %v851, %v957
    %v959 = vrcp.pop %v948
    %v960 = vmul.f32 %v852, %v959
    %v961 = vrcp.pop %v949
    %v962 = vmul.f32 %v853, %v961
    %v963 = vrcp.pop %v950
    %v964 = vmul.f32 %v854, %v963
    %v965 = vrcp.pop %v951
    %v966 = vmul.f32 %v855, %v965
    %v967 = vrcp.pop %v952
    %v968 = vmul.f32 %v856, %v967
    %v969 = vmul.f32 %v954, %v954
    %v970 = vmul.f32 %v956, %v956
    %v971 = vmul.f32 %v958, %v958
    %v972 = vmul.f32 %v960, %v960
    %v973 = vmul.f32 %v962, %v962
    %v974 = vmul.f32 %v964, %v964
    %v975 = vmul.f32 %v966, %v966
    %v976 = vmul.f32 %v968, %v968
    %v977 = vsel %vm76, %v969, 0.0
    %978 = vadd.xlane.f32.xlu0 %v977
    %v979 = vpop.xlane.xlu0 %978
    %v980 = vsel %vm76, %v970, 0.0
    %981 = vadd.xlane.f32.xlu0 %v980
    %v982 = vpop.xlane.xlu0 %981
    %v983 = vsel %vm76, %v971, 0.0
    %984 = vadd.xlane.f32.xlu0 %v983
    %v985 = vpop.xlane.xlu0 %984
    %v986 = vsel %vm76, %v972, 0.0
    %987 = vadd.xlane.f32.xlu0 %v986
    %v988 = vpop.xlane.xlu0 %987
    %v989 = vsel %vm76, %v973, 0.0
    %990 = vadd.xlane.f32.xlu0 %v989
    %v991 = vpop.xlane.xlu0 %990
    %v992 = vsel %vm76, %v974, 0.0
    %993 = vadd.xlane.f32.xlu0 %v992
    %v994 = vpop.xlane.xlu0 %993
    %v995 = vsel %vm76, %v975, 0.0
    %996 = vadd.xlane.f32.xlu0 %v995
    %v997 = vpop.xlane.xlu0 %996
    %v998 = vsel %vm76, %v976, 0.0
    %999 = vadd.xlane.f32.xlu0 %v998
    %v1000 = vpop.xlane.xlu0 %999
    %v1001 = vsel %vm101, %v979, 0.0
    %v1002 = vrot.slane %v1001, 4
    %v1003 = vadd.f32 %v1001, %v1002
    %v1004 = vrot.slane %v1003, 2
    %v1005 = vadd.f32 %v1003, %v1004
    %v1006 = vrot.slane %v1005, 1
    %v1007 = vadd.f32 %v1005, %v1006
    %v1008 = vsel %vm101, %v982, 0.0
    %v1009 = vrot.slane %v1008, 4
    %v1010 = vadd.f32 %v1008, %v1009
    %v1011 = vrot.slane %v1010, 2
    %v1012 = vadd.f32 %v1010, %v1011
    %v1013 = vrot.slane %v1012, 1
    %v1014 = vadd.f32 %v1012, %v1013
    %v1015 = vsel %vm101, %v985, 0.0
    %v1016 = vrot.slane %v1015, 4
    %v1017 = vadd.f32 %v1015, %v1016
    %v1018 = vrot.slane %v1017, 2
    %v1019 = vadd.f32 %v1017, %v1018
    %v1020 = vrot.slane %v1019, 1
    %v1021 = vadd.f32 %v1019, %v1020
    %v1022 = vsel %vm101, %v988, 0.0
    %v1023 = vrot.slane %v1022, 4
    %v1024 = vadd.f32 %v1022, %v1023
    %v1025 = vrot.slane %v1024, 2
    %v1026 = vadd.f32 %v1024, %v1025
    %v1027 = vrot.slane %v1026, 1
    %v1028 = vadd.f32 %v1026, %v1027
    %v1029 = vsel %vm101, %v991, 0.0
    %v1030 = vrot.slane %v1029, 4
    %v1031 = vadd.f32 %v1029, %v1030
    %v1032 = vrot.slane %v1031, 2
    %v1033 = vadd.f32 %v1031, %v1032
    %v1034 = vrot.slane %v1033, 1
    %v1035 = vadd.f32 %v1033, %v1034
    %v1036 = vsel %vm101, %v994, 0.0
    %v1037 = vrot.slane %v1036, 4
    %v1038 = vadd.f32 %v1036, %v1037
    %v1039 = vrot.slane %v1038, 2
    %v1040 = vadd.f32 %v1038, %v1039
    %v1041 = vrot.slane %v1040, 1
    %v1042 = vadd.f32 %v1040, %v1041
    %v1043 = vsel %vm101, %v997, 0.0
    %v1044 = vrot.slane %v1043, 4
    %v1045 = vadd.f32 %v1043, %v1044
    %v1046 = vrot.slane %v1045, 2
    %v1047 = vadd.f32 %v1045, %v1046
    %v1048 = vrot.slane %v1047, 1
    %v1049 = vadd.f32 %v1047, %v1048
    %v1050 = vsel %vm101, %v1000, 0.0
    %v1051 = vrot.slane %v1050, 4
    %v1052 = vadd.f32 %v1050, %v1051
    %v1053 = vrot.slane %v1052, 2
    %v1054 = vadd.f32 %v1052, %v1053
    %v1055 = vrot.slane %v1054, 1
    %v1056 = vadd.f32 %v1054, %v1055
    %v1057 = vadd.f32 %v1007, 1e-06
    %v1058 = vadd.f32 %v1014, 1e-06
    %v1059 = vadd.f32 %v1021, 1e-06
    %v1060 = vadd.f32 %v1028, 1e-06
    %v1061 = vadd.f32 %v1035, 1e-06
    %v1062 = vadd.f32 %v1042, 1e-06
    %v1063 = vadd.f32 %v1049, 1e-06
    %v1064 = vadd.f32 %v1056, 1e-06
    %v1065 = vrsqrt.pop %v1057
    %v1066 = vmul.f32 %v1057, %v1065
    %vm1067 = vcmp.eq.f32.partialorder %v1057, inf
    %v1068 = vsel %vm1067, %v1057, %v1066
    %vm1069 = vcmp.eq.f32.partialorder %v1057, 0.0
    %v1070 = vand.u32 %v1057, 2147483648
    %v1071 = vsel %vm1069, %v1070, %v1068
    %v1072 = vrsqrt.pop %v1058
    %v1073 = vmul.f32 %v1058, %v1072
    %vm1074 = vcmp.eq.f32.partialorder %v1058, inf
    %v1075 = vsel %vm1074, %v1058, %v1073
    %vm1076 = vcmp.eq.f32.partialorder %v1058, 0.0
    %v1077 = vand.u32 %v1058, 2147483648
    %v1078 = vsel %vm1076, %v1077, %v1075
    %v1079 = vrsqrt.pop %v1059
    %v1080 = vmul.f32 %v1059, %v1079
    %vm1081 = vcmp.eq.f32.partialorder %v1059, inf
    %v1082 = vsel %vm1081, %v1059, %v1080
    %vm1083 = vcmp.eq.f32.partialorder %v1059, 0.0
    %v1084 = vand.u32 %v1059, 2147483648
    %v1085 = vsel %vm1083, %v1084, %v1082
    %v1086 = vrsqrt.pop %v1060
    %v1087 = vmul.f32 %v1060, %v1086
    %vm1088 = vcmp.eq.f32.partialorder %v1060, inf
    %v1089 = vsel %vm1088, %v1060, %v1087
    %vm1090 = vcmp.eq.f32.partialorder %v1060, 0.0
    %v1091 = vand.u32 %v1060, 2147483648
    %v1092 = vsel %vm1090, %v1091, %v1089
    %v1093 = vrsqrt.pop %v1061
    %v1094 = vmul.f32 %v1061, %v1093
    %vm1095 = vcmp.eq.f32.partialorder %v1061, inf
    %v1096 = vsel %vm1095, %v1061, %v1094
    %vm1097 = vcmp.eq.f32.partialorder %v1061, 0.0
    %v1098 = vand.u32 %v1061, 2147483648
    %v1099 = vsel %vm1097, %v1098, %v1096
    %v1100 = vrsqrt.pop %v1062
    %v1101 = vmul.f32 %v1062, %v1100
    %vm1102 = vcmp.eq.f32.partialorder %v1062, inf
    %v1103 = vsel %vm1102, %v1062, %v1101
    %vm1104 = vcmp.eq.f32.partialorder %v1062, 0.0
    %v1105 = vand.u32 %v1062, 2147483648
    %v1106 = vsel %vm1104, %v1105, %v1103
    %v1107 = vrsqrt.pop %v1063
    %v1108 = vmul.f32 %v1063, %v1107
    %vm1109 = vcmp.eq.f32.partialorder %v1063, inf
    %v1110 = vsel %vm1109, %v1063, %v1108
    %vm1111 = vcmp.eq.f32.partialorder %v1063, 0.0
    %v1112 = vand.u32 %v1063, 2147483648
    %v1113 = vsel %vm1111, %v1112, %v1110
    %v1114 = vrsqrt.pop %v1064
    %v1115 = vmul.f32 %v1064, %v1114
    %vm1116 = vcmp.eq.f32.partialorder %v1064, inf
    %v1117 = vsel %vm1116, %v1064, %v1115
    %vm1118 = vcmp.eq.f32.partialorder %v1064, 0.0
    %v1119 = vand.u32 %v1064, 2147483648
    %v1120 = vsel %vm1118, %v1119, %v1117
    %v1121 = vrcp.pop %v1071
    %v1122 = vmul.f32 %v954, %v1121
    %v1123 = vrcp.pop %v1078
    %v1124 = vmul.f32 %v956, %v1123
    %v1125 = vrcp.pop %v1085
    %v1126 = vmul.f32 %v958, %v1125
    %v1127 = vrcp.pop %v1092
    %v1128 = vmul.f32 %v960, %v1127
    %v1129 = vrcp.pop %v1099
    %v1130 = vmul.f32 %v962, %v1129
    %v1131 = vrcp.pop %v1106
    %v1132 = vmul.f32 %v964, %v1131
    %v1133 = vrcp.pop %v1113
    %v1134 = vmul.f32 %v966, %v1133
    %v1135 = vrcp.pop %v1120
    %v1136 = vmul.f32 %v968, %v1135
    %v1137 = vmul.f32 %v1122, 2.0
    %v1138 = vmul.f32 %v1124, 2.0
    %v1139 = vmul.f32 %v1126, 2.0
    %v1140 = vmul.f32 %v1128, 2.0
    %v1141 = vmul.f32 %v1130, 2.0
    %v1142 = vmul.f32 %v1132, 2.0
    %v1143 = vmul.f32 %v1134, 2.0
    %v1144 = vmul.f32 %v1136, 2.0
    %v1145 = vadd.f32 %v27, %v1137
    %v1146 = vadd.f32 %v28, %v1138
    %v1147 = vadd.f32 %v29, %v1139
    %v1148 = vadd.f32 %v30, %v1140
    %v1149 = vadd.f32 %v31, %v1141
    %v1150 = vadd.f32 %v32, %v1142
    %v1151 = vadd.f32 %v33, %v1143
    %v1152 = vadd.f32 %v34, %v1144
    %v1153 = vmul.f32 %v1145, %v35
    %v1154 = vmul.f32 %v1146, %v36
    %v1155 = vmul.f32 %v1147, %v37
    %v1156 = vmul.f32 %v1148, %v38
    %v1157 = vmul.f32 %v1149, %v39
    %v1158 = vmul.f32 %v1150, %v40
    %v1159 = vmul.f32 %v1151, %v41
    %v1160 = vmul.f32 %v1152, %v42
    %v1161 = vsel %vm76, %v1153, 0.0
    %v1162 = vsel %vm76, %v1154, 0.0
    %v1163 = vadd.f32 %v1161, %v1162
    %v1164 = vsel %vm76, %v1155, 0.0
    %v1165 = vadd.f32 %v1163, %v1164
    %v1166 = vsel %vm76, %v1156, 0.0
    %v1167 = vadd.f32 %v1165, %v1166
    %v1168 = vsel %vm76, %v1157, 0.0
    %v1169 = vadd.f32 %v1167, %v1168
    %v1170 = vsel %vm76, %v1158, 0.0
    %v1171 = vadd.f32 %v1169, %v1170
    %v1172 = vsel %vm76, %v1159, 0.0
    %v1173 = vadd.f32 %v1171, %v1172
    %v1174 = vsel %vm76, %v1160, 0.0
    %v1175 = vadd.f32 %v1173, %v1174
    %1177 = vset.pattern.permute.xlu0 0
    %1178 = vperm.xlu0 %1177, %v1175
    %v1179 = vpop.permute.xlu0 %1178
    %v1181 = vmul.f32 %v1179, %v398
    %1182 = vset.pattern.permute.xlu0 1
    %1183 = vperm.xlu0 %1182, %v1175
    %v1184 = vpop.permute.xlu0 %1183
    %v1186 = vmul.f32 %v1184, %v408
    %v1187 = vadd.f32 %v1181, %v1186
    %1188 = vset.pattern.permute.xlu0 2
    %1189 = vperm.xlu0 %1188, %v1175
    %v1190 = vpop.permute.xlu0 %1189
    %v1192 = vmul.f32 %v1190, %v419
    %v1193 = vadd.f32 %v1187, %v1192
    %1194 = vset.pattern.permute.xlu0 3
    %1195 = vperm.xlu0 %1194, %v1175
    %v1196 = vpop.permute.xlu0 %1195
    %v1198 = vmul.f32 %v1196, %v430
    %v1199 = vadd.f32 %v1193, %v1198
    %1200 = vset.pattern.permute.xlu0 4
    %1201 = vperm.xlu0 %1200, %v1175
    %v1202 = vpop.permute.xlu0 %1201
    %v1204 = vmul.f32 %v1202, %v441
    %v1205 = vadd.f32 %v1199, %v1204
    %1206 = vset.pattern.permute.xlu0 5
    %1207 = vperm.xlu0 %1206, %v1175
    %v1208 = vpop.permute.xlu0 %1207
    %v1210 = vmul.f32 %v1208, %v452
    %v1211 = vadd.f32 %v1205, %v1210
    %1212 = vset.pattern.permute.xlu0 6
    %1213 = vperm.xlu0 %1212, %v1175
    %v1214 = vpop.permute.xlu0 %1213
    %v1216 = vmul.f32 %v1214, %v463
    %v1217 = vadd.f32 %v1211, %v1216
    %1218 = vset.pattern.permute.xlu0 7
    %1219 = vperm.xlu0 %1218, %v1175
    %v1220 = vpop.permute.xlu0 %1219
    %v1222 = vmul.f32 %v1220, %v474
    %v1223 = vadd.f32 %v1217, %v1222
    %1224 = vset.pattern.permute.xlu0 8
    %1225 = vperm.xlu0 %1224, %v1175
    %v1226 = vpop.permute.xlu0 %1225
    %v1228 = vmul.f32 %v1226, %v485
    %v1229 = vadd.f32 %v1223, %v1228
    %1230 = vset.pattern.permute.xlu0 9
    %1231 = vperm.xlu0 %1230, %v1175
    %v1232 = vpop.permute.xlu0 %1231
    %v1234 = vmul.f32 %v1232, %v496
    %v1235 = vadd.f32 %v1229, %v1234
    %1236 = vset.pattern.permute.xlu0 10
    %1237 = vperm.xlu0 %1236, %v1175
    %v1238 = vpop.permute.xlu0 %1237
    %v1240 = vmul.f32 %v1238, %v507
    %v1241 = vadd.f32 %v1235, %v1240
    %1242 = vset.pattern.permute.xlu0 11
    %1243 = vperm.xlu0 %1242, %v1175
    %v1244 = vpop.permute.xlu0 %1243
    %v1246 = vmul.f32 %v1244, %v518
    %v1247 = vadd.f32 %v1241, %v1246
    %1248 = vset.pattern.permute.xlu0 12
    %1249 = vperm.xlu0 %1248, %v1175
    %v1250 = vpop.permute.xlu0 %1249
    %v1252 = vmul.f32 %v1250, %v529
    %v1253 = vadd.f32 %v1247, %v1252
    %1254 = vset.pattern.permute.xlu0 13
    %1255 = vperm.xlu0 %1254, %v1175
    %v1256 = vpop.permute.xlu0 %1255
    %v1258 = vmul.f32 %v1256, %v540
    %v1259 = vadd.f32 %v1253, %v1258
    %1260 = vset.pattern.permute.xlu0 14
    %1261 = vperm.xlu0 %1260, %v1175
    %v1262 = vpop.permute.xlu0 %1261
    %v1264 = vmul.f32 %v1262, %v551
    %v1265 = vadd.f32 %v1259, %v1264
    %1266 = vset.pattern.permute.xlu0 15
    %1267 = vperm.xlu0 %1266, %v1175
    %v1268 = vpop.permute.xlu0 %1267
    %v1270 = vmul.f32 %v1268, %v562
    %v1271 = vadd.f32 %v1265, %v1270
    %1272 = vset.pattern.permute.xlu0 16
    %1273 = vperm.xlu0 %1272, %v1175
    %v1274 = vpop.permute.xlu0 %1273
    %v1276 = vmul.f32 %v1274, %v573
    %v1277 = vadd.f32 %v1271, %v1276
    %1278 = vset.pattern.permute.xlu0 17
    %1279 = vperm.xlu0 %1278, %v1175
    %v1280 = vpop.permute.xlu0 %1279
    %v1282 = vmul.f32 %v1280, %v584
    %v1283 = vadd.f32 %v1277, %v1282
    %1284 = vset.pattern.permute.xlu0 18
    %1285 = vperm.xlu0 %1284, %v1175
    %v1286 = vpop.permute.xlu0 %1285
    %v1288 = vmul.f32 %v1286, %v595
    %v1289 = vadd.f32 %v1283, %v1288
    %1290 = vset.pattern.permute.xlu0 19
    %1291 = vperm.xlu0 %1290, %v1175
    %v1292 = vpop.permute.xlu0 %1291
    %v1294 = vmul.f32 %v1292, %v606
    %v1295 = vadd.f32 %v1289, %v1294
    %1296 = vset.pattern.permute.xlu0 20
    %1297 = vperm.xlu0 %1296, %v1175
    %v1298 = vpop.permute.xlu0 %1297
    %v1300 = vmul.f32 %v1298, %v617
    %v1301 = vadd.f32 %v1295, %v1300
    %1302 = vset.pattern.permute.xlu0 21
    %1303 = vperm.xlu0 %1302, %v1175
    %v1304 = vpop.permute.xlu0 %1303
    %v1306 = vmul.f32 %v1304, %v628
    %v1307 = vadd.f32 %v1301, %v1306
    %1308 = vset.pattern.permute.xlu0 22
    %1309 = vperm.xlu0 %1308, %v1175
    %v1310 = vpop.permute.xlu0 %1309
    %v1312 = vmul.f32 %v1310, %v639
    %v1313 = vadd.f32 %v1307, %v1312
    %1314 = vset.pattern.permute.xlu0 23
    %1315 = vperm.xlu0 %1314, %v1175
    %v1316 = vpop.permute.xlu0 %1315
    %v1318 = vmul.f32 %v1316, %v650
    %v1319 = vadd.f32 %v1313, %v1318
    %1320 = vset.pattern.permute.xlu0 24
    %1321 = vperm.xlu0 %1320, %v1175
    %v1322 = vpop.permute.xlu0 %1321
    %v1324 = vmul.f32 %v1322, %v661
    %v1325 = vadd.f32 %v1319, %v1324
    %1326 = vset.pattern.permute.xlu0 25
    %1327 = vperm.xlu0 %1326, %v1175
    %v1328 = vpop.permute.xlu0 %1327
    %v1330 = vmul.f32 %v1328, %v672
    %v1331 = vadd.f32 %v1325, %v1330
    %1332 = vset.pattern.permute.xlu0 26
    %1333 = vperm.xlu0 %1332, %v1175
    %v1334 = vpop.permute.xlu0 %1333
    %v1336 = vmul.f32 %v1334, %v683
    %v1337 = vadd.f32 %v1331, %v1336
    %1338 = vset.pattern.permute.xlu0 27
    %1339 = vperm.xlu0 %1338, %v1175
    %v1340 = vpop.permute.xlu0 %1339
    %v1342 = vmul.f32 %v1340, %v694
    %v1343 = vadd.f32 %v1337, %v1342
    %1344 = vset.pattern.permute.xlu0 28
    %1345 = vperm.xlu0 %1344, %v1175
    %v1346 = vpop.permute.xlu0 %1345
    %v1348 = vmul.f32 %v1346, %v705
    %v1349 = vadd.f32 %v1343, %v1348
    %1350 = vset.pattern.permute.xlu0 29
    %1351 = vperm.xlu0 %1350, %v1175
    %v1352 = vpop.permute.xlu0 %1351
    %v1354 = vmul.f32 %v1352, %v716
    %v1355 = vadd.f32 %v1349, %v1354
    %1356 = vset.pattern.permute.xlu0 30
    %1357 = vperm.xlu0 %1356, %v1175
    %v1358 = vpop.permute.xlu0 %1357
    %v1360 = vmul.f32 %v1358, %v727
    %v1361 = vadd.f32 %v1355, %v1360
    %1362 = vset.pattern.permute.xlu0 31
    %1363 = vperm.xlu0 %1362, %v1175
    %v1364 = vpop.permute.xlu0 %1363
    %v1366 = vmul.f32 %v1364, %v738
    %v1367 = vadd.f32 %v1361, %v1366
    %v1368 = vadd.f32 %v1367, %v745
    %v1369 = vsel %vm45, %v1368, -inf
    %1370 = vmax.xlane.f32.xlu0 %v1369
    %v1371 = vpop.xlane.xlu0 %1370
    %v1372 = vsub.f32 %v1368, %v1371
    %v1373 = vmul.f32 %v1372, 1.442695
    %v1374 = vpow.pop %v1373
    %v1375 = vsel %vm45, %v1374, 0.0
    %1376 = vadd.xlane.f32.xlu0 %v1375
    %v1377 = vpop.xlane.xlu0 %1376
    %v1378 = vlog2.pop %v1377
    %v1379 = vmul.f32 %v1378, 0.6931472
    %v1380 = vsub.f32 %v1372, %v1379
    %v1381 = vsub.f32 %v59, %v1380
    %v1382 = vmul.f32 %v56, %v1381
    %v1383 = vsel %vm45, %v1382, 0.0
    %1384 = vadd.xlane.f32.xlu0 %v1383
    %v1385 = vpop.xlane.xlu0 %1384
    %v1386 = vsel %vm101, %v1385, 0.0
    %v1387 = vrot.slane %v1386, 4
    %v1388 = vadd.f32 %v1386, %v1387
    %v1389 = vrot.slane %v1388, 2
    %v1390 = vadd.f32 %v1388, %v1389
    %v1391 = vrot.slane %v1390, 1
    %v1392 = vadd.f32 %v1390, %v1391
    %v1393 = vmul.f32 %v1392, 0.25
    %vm1394 = vcmask 0
    %1395 = vst.msk [vmem:[#allocation2] sm:$0x1] %vm1394, %v1393
    // Predicated region
    $region30: #{vat_forward.1} parent=1 // pred_check
      _
    $region31: #{vat_forward.1} parent=1 // pred_check_branch
      %1397 = sbr.rel (0) target = $region33
    $region32: #{vat_forward.1} parent=1 // pred_region
      %s1399 = ssub.s32 16, 16
      %1400 = vsyncadd [#allocation3], %s1399
      %s1402 = sshll.u32 [#allocation2], 4
      %s1403 = int_to_ptr.vmem [resolvable:$true] %s1402
      %1405 = dma.vmem_to_hbm [thread:$0]  %s1403, 16, %s7, [#allocation3]
    $region33: #{vat_forward.1} parent=1 // pred_fallthru
      _
    // Predicated region
    $region34: #{vat_forward.1} parent=1 // pred_check
      _
    $region35: #{vat_forward.1} parent=1 // pred_check_branch
      %1407 = sbr.rel (0) target = $region37
    $region36: #{vat_forward.1} parent=1 // pred_region
      %1408 = dma.done [#allocation3], 16
    $region37: #{vat_forward.1} parent=1 // pred_fallthru
      _
    %1409 = vsyncpa [#allocation3], 1

</llo_original>
